<compile_context>
chip_gen: v7x
topology: tpu7x:2x2x1
jax: 0.10.0
libtpu: 0.0.40
codegen_flags: <defaults>
</compile_context>

<pallas_src>
import jax
import jax.numpy as jnp
from jax.experimental import pallas as pl
from jax.experimental.pallas import tpu as pltpu


def _maxpool2x2_kernel(x_ref, o_ref):
    """x_ref: (Rb, 2, W) block of vertical row pairs; o_ref: (Rb, W//2)."""
    top = x_ref[:, 0, :].astype(jnp.float32)          # (Rb, W)
    bot = x_ref[:, 1, :].astype(jnp.float32)          # (Rb, W)
    v = jnp.maximum(top, bot)                         # vertical 2-max (VPU)

    w = v.shape[-1]
    wout = o_ref.shape[-1]

    # Exact 0/1 selection matrices: sel_even[w, j] = (w == 2j),
    # sel_odd[w, j] = (w == 2j + 1).  Built from cheap 2-D iotas each step.
    w_idx = jax.lax.broadcasted_iota(jnp.int32, (w, wout), 0)
    j_idx = jax.lax.broadcasted_iota(jnp.int32, (w, wout), 1)
    sel_even = jnp.where(w_idx == 2 * j_idx, 1.0, 0.0).astype(jnp.float32)
    sel_odd = jnp.where(w_idx == 2 * j_idx + 1, 1.0, 0.0).astype(jnp.float32)

    # De-interleave even / odd columns on the MXU (idle in this mem-bound
    # kernel), then take the horizontal pairwise max on the VPU.
    even = jnp.dot(v, sel_even, precision=jax.lax.Precision.HIGHEST,
                   preferred_element_type=jnp.float32)
    odd = jnp.dot(v, sel_odd, precision=jax.lax.Precision.HIGHEST,
                  preferred_element_type=jnp.float32)
    o_ref[...] = jnp.maximum(even, odd).astype(o_ref.dtype)


def _pick_block_rows(num_rows, w):
    """Largest multiple-of-8 divisor of num_rows whose (Rb, 2, W) input tile
    fits a ~8 MiB VMEM budget (the (2, W) slab pads to 8 sublanes in VMEM).
    Falls back to one full-extent block, which is always a legal block shape.
    """
    w_pad = max(-(-w // 128) * 128, 128)
    bytes_per_row_pair = 8 * w_pad * 4        # padded sublanes, f32 upper bound
    budget = 8 * 1024 * 1024
    cap = min(max(budget // bytes_per_row_pair, 8), num_rows)
    rb = (cap // 8) * 8
    while rb >= 8:
        if num_rows % rb == 0:
            return rb
        rb -= 8
    # Ragged row count: single block over all rows (fine for small inputs).
    return num_rows


def downsample(x):
    """Pallas TPU implementation of DownSample.forward == max_pool2d(x, 2)."""
    n, c, h, w = x.shape
    hout, wout = h // 2, w // 2
    if hout == 0 or wout == 0:
        return jnp.zeros((n, c, hout, wout), x.dtype)

    # Floor mode: drop trailing odd row / column (no-op when H, W are even).
    x = x[:, :, : 2 * hout, : 2 * wout]

    rows = n * c * hout
    w_in = 2 * wout
    x3 = x.reshape(rows, 2, w_in)             # free (contiguous) reshape

    rb = _pick_block_rows(rows, w_in)
    grid = (rows // rb,)

    out = pl.pallas_call(
        _maxpool2x2_kernel,
        out_shape=jax.ShapeDtypeStruct((rows, wout), x.dtype),
        grid_spec=pltpu.PrefetchScalarGridSpec(
            num_scalar_prefetch=0,
            grid=grid,
            in_specs=[pl.BlockSpec((rb, 2, w_in), lambda i: (i, 0, 0))],
            out_specs=pl.BlockSpec((rb, wout), lambda i: (i, 0)),
        ),
        compiler_params=pltpu.CompilerParams(
            # Independent output rows per grid step: lets the v7x megacore
            # split the row blocks across both TensorCores.
            dimension_semantics=("parallel",),
        ),
    )(x3)
    return out.reshape(n, c, hout, wout)


def downsample_ref(x):
    """Pure-JAX reference: max_pool2d(x, kernel_size=2, stride=2)."""
    n, c, h, w = x.shape
    hout, wout = h // 2, w // 2
    xc = x[:, :, : 2 * hout, : 2 * wout]
    return xc.reshape(n, c, hout, 2, wout, 2).max(axis=(3, 5))


if __name__ == "__main__":
    key = jax.random.PRNGKey(0)
    x = jax.random.normal(key, (2, 4, 16, 16), jnp.float32)

    y = downsample(x)
    y = jax.block_until_ready(y)

    ref = downsample_ref(x)
    assert y.shape == ref.shape, (y.shape, ref.shape)
    assert jnp.allclose(y, ref, atol=1e-4, rtol=1e-4), float(
        jnp.max(jnp.abs(y - ref)))
    print("KERNEL_OK")
</pallas_src>

<mosaic_0001>
module attributes {stable_mosaic.version = 11 : i64} {
  func.func @_maxpool2x2_kernel(%arg0: i32, %arg1: memref<64x2x16xf32, #tpu.memory_space<vmem>>, %arg2: memref<64x8xf32, #tpu.memory_space<vmem>>) attributes {dimension_semantics = [#tpu.dimension_semantics<parallel>], iteration_bounds = array<i64: 1>, scalar_prefetch = 0 : i64, scratch_operands = 0 : i64, tpu.core_type = #tpu.core_type<tc>, window_params = [{transform_indices = @transform_0, window_bounds = array<i64: 64, 2, 16>}, {transform_indices = @transform_1, window_bounds = array<i64: 64, 8>}]} {
    %c0 = arith.constant 0 : index
    %c0_0 = arith.constant 0 : index
    %c0_1 = arith.constant 0 : index
    %0 = vector.load %arg1[%c0, %c0_0, %c0_1] : memref<64x2x16xf32, #tpu.memory_space<vmem>>, vector<64x1x16xf32>
    %1 = vector.shape_cast %0 : vector<64x1x16xf32> to vector<64x16xf32>
    %c0_2 = arith.constant 0 : index
    %c1 = arith.constant 1 : index
    %c0_3 = arith.constant 0 : index
    %2 = vector.load %arg1[%c0_2, %c1, %c0_3] : memref<64x2x16xf32, #tpu.memory_space<vmem>>, vector<64x1x16xf32>
    %3 = vector.shape_cast %2 : vector<64x1x16xf32> to vector<64x16xf32>
    %4 = arith.maximumf %1, %3 : vector<64x16xf32>
    %5 = tpu.iota {dimensions = array<i32: 0>} : vector<16x8xi32>
    %6 = tpu.iota {dimensions = array<i32: 1>} : vector<16x8xi32>
    %c2_i32 = arith.constant 2 : i32
    %7 = vector.broadcast %c2_i32 : i32 to vector<16x8xi32>
    %8 = arith.muli %7, %6 : vector<16x8xi32>
    %9 = arith.cmpi eq, %5, %8 : vector<16x8xi32>
    %cst = arith.constant 1.000000e+00 : f32
    %cst_4 = arith.constant 0.000000e+00 : f32
    %10 = vector.broadcast %cst : f32 to vector<16x8xf32>
    %11 = vector.broadcast %cst_4 : f32 to vector<16x8xf32>
    %12 = arith.select %9, %10, %11 : vector<16x8xi1>, vector<16x8xf32>
    %c2_i32_5 = arith.constant 2 : i32
    %13 = vector.broadcast %c2_i32_5 : i32 to vector<16x8xi32>
    %14 = arith.muli %13, %6 : vector<16x8xi32>
    %c1_i32 = arith.constant 1 : i32
    %15 = vector.broadcast %c1_i32 : i32 to vector<16x8xi32>
    %16 = arith.addi %14, %15 : vector<16x8xi32>
    %17 = arith.cmpi eq, %5, %16 : vector<16x8xi32>
    %cst_6 = arith.constant 1.000000e+00 : f32
    %cst_7 = arith.constant 0.000000e+00 : f32
    %18 = vector.broadcast %cst_6 : f32 to vector<16x8xf32>
    %19 = vector.broadcast %cst_7 : f32 to vector<16x8xf32>
    %20 = arith.select %17, %18, %19 : vector<16x8xi1>, vector<16x8xf32>
    %cst_8 = arith.constant dense<0.000000e+00> : vector<64x8xf32>
    %21 = tpu.matmul %4, %12, %cst_8 {dimension_numbers = #tpu.dot_dimension_numbers<[1], [0], [0], [1], [0, 0, 1, 1], [], []>, precision = #tpu.contract_precision<fp32>} : vector<64x16xf32>, vector<16x8xf32>, vector<64x8xf32> -> vector<64x8xf32>
    %cst_9 = arith.constant dense<0.000000e+00> : vector<64x8xf32>
    %22 = tpu.matmul %4, %20, %cst_9 {dimension_numbers = #tpu.dot_dimension_numbers<[1], [0], [0], [1], [0, 0, 1, 1], [], []>, precision = #tpu.contract_precision<fp32>} : vector<64x16xf32>, vector<16x8xf32>, vector<64x8xf32> -> vector<64x8xf32>
    %23 = arith.maximumf %21, %22 : vector<64x8xf32>
    %c0_10 = arith.constant 0 : index
    %c0_11 = arith.constant 0 : index
    %24 = vector.load %arg2[%c0_10, %c0_11] : memref<64x8xf32, #tpu.memory_space<vmem>>, vector<64x8xf32>
    tpu.vector_store %arg2[%c0_10, %c0_11], %23 {strides = array<i32>} : memref<64x8xf32, #tpu.memory_space<vmem>>, vector<64x8xf32>,
    return
  }
  func.func @transform_0(%arg0: i32) -> (i32, i32, i32) {
    %c0_i32 = arith.constant 0 : i32
    %c0_i32_0 = arith.constant 0 : i32
    %c0_i32_1 = arith.constant 0 : i32
    return %arg0, %c0_i32, %c0_i32_0 : i32, i32, i32
  }
  func.func @transform_1(%arg0: i32) -> (i32, i32) {
    %c0_i32 = arith.constant 0 : i32
    %c0_i32_0 = arith.constant 0 : i32
    return %arg0, %c0_i32 : i32, i32
  }
}

</mosaic_0001>

<llo_original>
// kernel: tpu_custom_call.1
$region0: #{tpu_custom_call.1}
  #allocation0 [shape = 'u32[]', space=smem, size = 0x4, offset = 0x4, fixed_abs, tag = 'smem constant byte address 0x4 - core index']
  #allocation1 [shape = 'u32[144,128]{1,0:T(1,128)}', space=vmem, size = 0x12000, scoped, tag = 'internal scratch']
  %s0 = inlined_call_operand.vmem [shape: f32[64,2,16], index: 0, kind: input, shape index: {}]
  %s1 = inlined_call_operand.vmem [shape: f32[64,8], index: 1, kind: output, shape index: {}]
  %s2 = sld [smem:[#allocation0]]
  $region14: #{tpu_custom_call.1} parent=0
    _
  %s4 = ssub.s32 1, %s2
  %s5 = scalar_select 0, %s4, %s2
  // Predicated region
  $region2: #{tpu_custom_call.1} parent=0 // pred_check
    _
  $region3: #{tpu_custom_call.1} parent=0 // pred_check_branch
    %7 = sbr.rel (0) target = $region5
  $region4: #{tpu_custom_call.1} parent=0 // pred_region
    _
  $region5: #{tpu_custom_call.1} parent=0 // pred_fallthru
    _
  %v8 = vld [vmem:[%s0] sm:$0x1]
  %v9 = vld [vmem:[%s0 + $0x2] sm:$0x1]
  %v10 = vld [vmem:[%s0 + $0x4] sm:$0x1]
  %v11 = vld [vmem:[%s0 + $0x6] sm:$0x1]
  %v12 = vld [vmem:[%s0 + $0x8] sm:$0x1]
  %v13 = vld [vmem:[%s0 + $0xa] sm:$0x1]
  %v14 = vld [vmem:[%s0 + $0xc] sm:$0x1]
  %v15 = vld [vmem:[%s0 + $0xe] sm:$0x1]
  %v16 = vld [vmem:[%s0 + $0x10] sm:$0x1]
  %v17 = vld [vmem:[%s0 + $0x12] sm:$0x1]
  %v18 = vld [vmem:[%s0 + $0x14] sm:$0x1]
  %v19 = vld [vmem:[%s0 + $0x16] sm:$0x1]
  %v20 = vld [vmem:[%s0 + $0x18] sm:$0x1]
  %v21 = vld [vmem:[%s0 + $0x1a] sm:$0x1]
  %v22 = vld [vmem:[%s0 + $0x1c] sm:$0x1]
  %v23 = vld [vmem:[%s0 + $0x1e] sm:$0x1]
  %v24 = vld [vmem:[%s0 + $0x20] sm:$0x1]
  %v25 = vld [vmem:[%s0 + $0x22] sm:$0x1]
  %v26 = vld [vmem:[%s0 + $0x24] sm:$0x1]
  %v27 = vld [vmem:[%s0 + $0x26] sm:$0x1]
  %v28 = vld [vmem:[%s0 + $0x28] sm:$0x1]
  %v29 = vld [vmem:[%s0 + $0x2a] sm:$0x1]
  %v30 = vld [vmem:[%s0 + $0x2c] sm:$0x1]
  %v31 = vld [vmem:[%s0 + $0x2e] sm:$0x1]
  %v32 = vld [vmem:[%s0 + $0x30] sm:$0x1]
  %v33 = vld [vmem:[%s0 + $0x32] sm:$0x1]
  %v34 = vld [vmem:[%s0 + $0x34] sm:$0x1]
  %v35 = vld [vmem:[%s0 + $0x36] sm:$0x1]
  %v36 = vld [vmem:[%s0 + $0x38] sm:$0x1]
  %v37 = vld [vmem:[%s0 + $0x3a] sm:$0x1]
  %v38 = vld [vmem:[%s0 + $0x3c] sm:$0x1]
  %v39 = vld [vmem:[%s0 + $0x3e] sm:$0x1]
  %v40 = vld [vmem:[%s0 + $0x40] sm:$0x1]
  %v41 = vld [vmem:[%s0 + $0x42] sm:$0x1]
  %v42 = vld [vmem:[%s0 + $0x44] sm:$0x1]
  %v43 = vld [vmem:[%s0 + $0x46] sm:$0x1]
  %v44 = vld [vmem:[%s0 + $0x48] sm:$0x1]
  %v45 = vld [vmem:[%s0 + $0x4a] sm:$0x1]
  %v46 = vld [vmem:[%s0 + $0x4c] sm:$0x1]
  %v47 = vld [vmem:[%s0 + $0x4e] sm:$0x1]
  %v48 = vld [vmem:[%s0 + $0x50] sm:$0x1]
  %v49 = vld [vmem:[%s0 + $0x52] sm:$0x1]
  %v50 = vld [vmem:[%s0 + $0x54] sm:$0x1]
  %v51 = vld [vmem:[%s0 + $0x56] sm:$0x1]
  %v52 = vld [vmem:[%s0 + $0x58] sm:$0x1]
  %v53 = vld [vmem:[%s0 + $0x5a] sm:$0x1]
  %v54 = vld [vmem:[%s0 + $0x5c] sm:$0x1]
  %v55 = vld [vmem:[%s0 + $0x5e] sm:$0x1]
  %v56 = vld [vmem:[%s0 + $0x60] sm:$0x1]
  %v57 = vld [vmem:[%s0 + $0x62] sm:$0x1]
  %v58 = vld [vmem:[%s0 + $0x64] sm:$0x1]
  %v59 = vld [vmem:[%s0 + $0x66] sm:$0x1]
  %v60 = vld [vmem:[%s0 + $0x68] sm:$0x1]
  %v61 = vld [vmem:[%s0 + $0x6a] sm:$0x1]
  %v62 = vld [vmem:[%s0 + $0x6c] sm:$0x1]
  %v63 = vld [vmem:[%s0 + $0x6e] sm:$0x1]
  %v64 = vld [vmem:[%s0 + $0x70] sm:$0x1]
  %v65 = vld [vmem:[%s0 + $0x72] sm:$0x1]
  %v66 = vld [vmem:[%s0 + $0x74] sm:$0x1]
  %v67 = vld [vmem:[%s0 + $0x76] sm:$0x1]
  %v68 = vld [vmem:[%s0 + $0x78] sm:$0x1]
  %v69 = vld [vmem:[%s0 + $0x7a] sm:$0x1]
  %v70 = vld [vmem:[%s0 + $0x7c] sm:$0x1]
  %v71 = vld [vmem:[%s0 + $0x7e] sm:$0x1]
  %v72 = vld [vmem:[%s0 + $0x1] sm:$0x1]
  %v73 = vld [vmem:[%s0 + $0x3] sm:$0x1]
  %v74 = vld [vmem:[%s0 + $0x5] sm:$0x1]
  %v75 = vld [vmem:[%s0 + $0x7] sm:$0x1]
  %v76 = vld [vmem:[%s0 + $0x9] sm:$0x1]
  %v77 = vld [vmem:[%s0 + $0xb] sm:$0x1]
  %v78 = vld [vmem:[%s0 + $0xd] sm:$0x1]
  %v79 = vld [vmem:[%s0 + $0xf] sm:$0x1]
  %v80 = vld [vmem:[%s0 + $0x11] sm:$0x1]
  %v81 = vld [vmem:[%s0 + $0x13] sm:$0x1]
  %v82 = vld [vmem:[%s0 + $0x15] sm:$0x1]
  %v83 = vld [vmem:[%s0 + $0x17] sm:$0x1]
  %v84 = vld [vmem:[%s0 + $0x19] sm:$0x1]
  %v85 = vld [vmem:[%s0 + $0x1b] sm:$0x1]
  %v86 = vld [vmem:[%s0 + $0x1d] sm:$0x1]
  %v87 = vld [vmem:[%s0 + $0x1f] sm:$0x1]
  %v88 = vld [vmem:[%s0 + $0x21] sm:$0x1]
  %v89 = vld [vmem:[%s0 + $0x23] sm:$0x1]
  %v90 = vld [vmem:[%s0 + $0x25] sm:$0x1]
  %v91 = vld [vmem:[%s0 + $0x27] sm:$0x1]
  %v92 = vld [vmem:[%s0 + $0x29] sm:$0x1]
  %v93 = vld [vmem:[%s0 + $0x2b] sm:$0x1]
  %v94 = vld [vmem:[%s0 + $0x2d] sm:$0x1]
  %v95 = vld [vmem:[%s0 + $0x2f] sm:$0x1]
  %v96 = vld [vmem:[%s0 + $0x31] sm:$0x1]
  %v97 = vld [vmem:[%s0 + $0x33] sm:$0x1]
  %v98 = vld [vmem:[%s0 + $0x35] sm:$0x1]
  %v99 = vld [vmem:[%s0 + $0x37] sm:$0x1]
  %v100 = vld [vmem:[%s0 + $0x39] sm:$0x1]
  %v101 = vld [vmem:[%s0 + $0x3b] sm:$0x1]
  %v102 = vld [vmem:[%s0 + $0x3d] sm:$0x1]
  %v103 = vld [vmem:[%s0 + $0x3f] sm:$0x1]
  %v104 = vld [vmem:[%s0 + $0x41] sm:$0x1]
  %v105 = vld [vmem:[%s0 + $0x43] sm:$0x1]
  %v106 = vld [vmem:[%s0 + $0x45] sm:$0x1]
  %v107 = vld [vmem:[%s0 + $0x47] sm:$0x1]
  %v108 = vld [vmem:[%s0 + $0x49] sm:$0x1]
  %v109 = vld [vmem:[%s0 + $0x4b] sm:$0x1]
  %v110 = vld [vmem:[%s0 + $0x4d] sm:$0x1]
  %v111 = vld [vmem:[%s0 + $0x4f] sm:$0x1]
  %v112 = vld [vmem:[%s0 + $0x51] sm:$0x1]
  %v113 = vld [vmem:[%s0 + $0x53] sm:$0x1]
  %v114 = vld [vmem:[%s0 + $0x55] sm:$0x1]
  %v115 = vld [vmem:[%s0 + $0x57] sm:$0x1]
  %v116 = vld [vmem:[%s0 + $0x59] sm:$0x1]
  %v117 = vld [vmem:[%s0 + $0x5b] sm:$0x1]
  %v118 = vld [vmem:[%s0 + $0x5d] sm:$0x1]
  %v119 = vld [vmem:[%s0 + $0x5f] sm:$0x1]
  %v120 = vld [vmem:[%s0 + $0x61] sm:$0x1]
  %v121 = vld [vmem:[%s0 + $0x63] sm:$0x1]
  %v122 = vld [vmem:[%s0 + $0x65] sm:$0x1]
  %v123 = vld [vmem:[%s0 + $0x67] sm:$0x1]
  %v124 = vld [vmem:[%s0 + $0x69] sm:$0x1]
  %v125 = vld [vmem:[%s0 + $0x6b] sm:$0x1]
  %v126 = vld [vmem:[%s0 + $0x6d] sm:$0x1]
  %v127 = vld [vmem:[%s0 + $0x6f] sm:$0x1]
  %v128 = vld [vmem:[%s0 + $0x71] sm:$0x1]
  %v129 = vld [vmem:[%s0 + $0x73] sm:$0x1]
  %v130 = vld [vmem:[%s0 + $0x75] sm:$0x1]
  %v131 = vld [vmem:[%s0 + $0x77] sm:$0x1]
  %v132 = vld [vmem:[%s0 + $0x79] sm:$0x1]
  %v133 = vld [vmem:[%s0 + $0x7b] sm:$0x1]
  %v134 = vld [vmem:[%s0 + $0x7d] sm:$0x1]
  %v135 = vld [vmem:[%s0 + $0x7f] sm:$0x1]
  %v136 = vmax.f32 %v8, %v72
  %v137 = vmax.f32 %v9, %v73
  %v138 = vmax.f32 %v10, %v74
  %v139 = vmax.f32 %v11, %v75
  %v140 = vmax.f32 %v12, %v76
  %v141 = vmax.f32 %v13, %v77
  %v142 = vmax.f32 %v14, %v78
  %v143 = vmax.f32 %v15, %v79
  %v144 = vmax.f32 %v16, %v80
  %v145 = vmax.f32 %v17, %v81
  %v146 = vmax.f32 %v18, %v82
  %v147 = vmax.f32 %v19, %v83
  %v148 = vmax.f32 %v20, %v84
  %v149 = vmax.f32 %v21, %v85
  %v150 = vmax.f32 %v22, %v86
  %v151 = vmax.f32 %v23, %v87
  %v152 = vmax.f32 %v24, %v88
  %v153 = vmax.f32 %v25, %v89
  %v154 = vmax.f32 %v26, %v90
  %v155 = vmax.f32 %v27, %v91
  %v156 = vmax.f32 %v28, %v92
  %v157 = vmax.f32 %v29, %v93
  %v158 = vmax.f32 %v30, %v94
  %v159 = vmax.f32 %v31, %v95
  %v160 = vmax.f32 %v32, %v96
  %v161 = vmax.f32 %v33, %v97
  %v162 = vmax.f32 %v34, %v98
  %v163 = vmax.f32 %v35, %v99
  %v164 = vmax.f32 %v36, %v100
  %v165 = vmax.f32 %v37, %v101
  %v166 = vmax.f32 %v38, %v102
  %v167 = vmax.f32 %v39, %v103
  %v168 = vmax.f32 %v40, %v104
  %v169 = vmax.f32 %v41, %v105
  %v170 = vmax.f32 %v42, %v106
  %v171 = vmax.f32 %v43, %v107
  %v172 = vmax.f32 %v44, %v108
  %v173 = vmax.f32 %v45, %v109
  %v174 = vmax.f32 %v46, %v110
  %v175 = vmax.f32 %v47, %v111
  %v176 = vmax.f32 %v48, %v112
  %v177 = vmax.f32 %v49, %v113
  %v178 = vmax.f32 %v50, %v114
  %v179 = vmax.f32 %v51, %v115
  %v180 = vmax.f32 %v52, %v116
  %v181 = vmax.f32 %v53, %v117
  %v182 = vmax.f32 %v54, %v118
  %v183 = vmax.f32 %v55, %v119
  %v184 = vmax.f32 %v56, %v120
  %v185 = vmax.f32 %v57, %v121
  %v186 = vmax.f32 %v58, %v122
  %v187 = vmax.f32 %v59, %v123
  %v188 = vmax.f32 %v60, %v124
  %v189 = vmax.f32 %v61, %v125
  %v190 = vmax.f32 %v62, %v126
  %v191 = vmax.f32 %v63, %v127
  %v192 = vmax.f32 %v64, %v128
  %v193 = vmax.f32 %v65, %v129
  %v194 = vmax.f32 %v66, %v130
  %v195 = vmax.f32 %v67, %v131
  %v196 = vmax.f32 %v68, %v132
  %v197 = vmax.f32 %v69, %v133
  %v198 = vmax.f32 %v70, %v134
  %v199 = vmax.f32 %v71, %v135
  %v200 = vlaneseq
  %v201 = vshrl.u32 %v200, 7
  %v202 = vadd.s32 %v201, 8
  %v203 = vlaneseq
  %v204 = vand.u32 %v203, 127
  %v205 = vmul.u32 %v204, 2
  %vm206 = vcmp.eq.s32.totalorder %v201, %v205
  %vm207 = vcmp.eq.s32.totalorder %v202, %v205
  %v208 = vsel %vm206, 1.0, 0.0
  %v209 = vsel %vm207, 1.0, 0.0
  %v210 = vadd.s32 %v205, 1
  %vm211 = vcmp.eq.s32.totalorder %v201, %v210
  %vm212 = vcmp.eq.s32.totalorder %v202, %v210
  %v213 = vsel %vm211, 1.0, 0.0
  %v214 = vsel %vm212, 1.0, 0.0
  %v279 = vrot.slane %v137, 7
  %vm280 = vcmask 1041409
  %v281 = vsel %vm280, %v279, %v136
  %v282 = vrot.slane %v138, 6
  %vm283 = vcmask 1042434
  %v284 = vsel %vm283, %v282, %v281
  %v285 = vrot.slane %v139, 5
  %vm286 = vcmask 1043459
  %v287 = vsel %vm286, %v285, %v284
  %v288 = vrot.slane %v140, 4
  %vm289 = vcmask 1044484
  %v290 = vsel %vm289, %v288, %v287
  %v291 = vrot.slane %v141, 3
  %vm292 = vcmask 1045509
  %v293 = vsel %vm292, %v291, %v290
  %v294 = vrot.slane %v142, 2
  %vm295 = vcmask 1046534
  %v296 = vsel %vm295, %v294, %v293
  %v297 = vrot.slane %v143, 1
  %vm298 = vcmask 1047559
  %v299 = vsel %vm298, %v297, %v296
  %v300 = vrot.slane %v145, 7
  %v301 = vsel %vm280, %v300, %v144
  %v302 = vrot.slane %v146, 6
  %v303 = vsel %vm283, %v302, %v301
  %v304 = vrot.slane %v147, 5
  %v305 = vsel %vm286, %v304, %v303
  %v306 = vrot.slane %v148, 4
  %v307 = vsel %vm289, %v306, %v305
  %v308 = vrot.slane %v149, 3
  %v309 = vsel %vm292, %v308, %v307
  %v310 = vrot.slane %v150, 2
  %v311 = vsel %vm295, %v310, %v309
  %v312 = vrot.slane %v151, 1
  %v313 = vsel %vm298, %v312, %v311
  %v314 = vrot.slane %v153, 7
  %v315 = vsel %vm280, %v314, %v152
  %v316 = vrot.slane %v154, 6
  %v317 = vsel %vm283, %v316, %v315
  %v318 = vrot.slane %v155, 5
  %v319 = vsel %vm286, %v318, %v317
  %v320 = vrot.slane %v156, 4
  %v321 = vsel %vm289, %v320, %v319
  %v322 = vrot.slane %v157, 3
  %v323 = vsel %vm292, %v322, %v321
  %v324 = vrot.slane %v158, 2
  %v325 = vsel %vm295, %v324, %v323
  %v326 = vrot.slane %v159, 1
  %v327 = vsel %vm298, %v326, %v325
  %v328 = vrot.slane %v161, 7
  %v329 = vsel %vm280, %v328, %v160
  %v330 = vrot.slane %v162, 6
  %v331 = vsel %vm283, %v330, %v329
  %v332 = vrot.slane %v163, 5
  %v333 = vsel %vm286, %v332, %v331
  %v334 = vrot.slane %v164, 4
  %v335 = vsel %vm289, %v334, %v333
  %v336 = vrot.slane %v165, 3
  %v337 = vsel %vm292, %v336, %v335
  %v338 = vrot.slane %v166, 2
  %v339 = vsel %vm295, %v338, %v337
  %v340 = vrot.slane %v167, 1
  %v341 = vsel %vm298, %v340, %v339
  %v342 = vrot.slane %v169, 7
  %v343 = vsel %vm280, %v342, %v168
  %v344 = vrot.slane %v170, 6
  %v345 = vsel %vm283, %v344, %v343
  %v346 = vrot.slane %v171, 5
  %v347 = vsel %vm286, %v346, %v345
  %v348 = vrot.slane %v172, 4
  %v349 = vsel %vm289, %v348, %v347
  %v350 = vrot.slane %v173, 3
  %v351 = vsel %vm292, %v350, %v349
  %v352 = vrot.slane %v174, 2
  %v353 = vsel %vm295, %v352, %v351
  %v354 = vrot.slane %v175, 1
  %v355 = vsel %vm298, %v354, %v353
  %v356 = vrot.slane %v177, 7
  %v357 = vsel %vm280, %v356, %v176
  %v358 = vrot.slane %v178, 6
  %v359 = vsel %vm283, %v358, %v357
  %v360 = vrot.slane %v179, 5
  %v361 = vsel %vm286, %v360, %v359
  %v362 = vrot.slane %v180, 4
  %v363 = vsel %vm289, %v362, %v361
  %v364 = vrot.slane %v181, 3
  %v365 = vsel %vm292, %v364, %v363
  %v366 = vrot.slane %v182, 2
  %v367 = vsel %vm295, %v366, %v365
  %v368 = vrot.slane %v183, 1
  %v369 = vsel %vm298, %v368, %v367
  %v370 = vrot.slane %v185, 7
  %v371 = vsel %vm280, %v370, %v184
  %v372 = vrot.slane %v186, 6
  %v373 = vsel %vm283, %v372, %v371
  %v374 = vrot.slane %v187, 5
  %v375 = vsel %vm286, %v374, %v373
  %v376 = vrot.slane %v188, 4
  %v377 = vsel %vm289, %v376, %v375
  %v378 = vrot.slane %v189, 3
  %v379 = vsel %vm292, %v378, %v377
  %v380 = vrot.slane %v190, 2
  %v381 = vsel %vm295, %v380, %v379
  %v382 = vrot.slane %v191, 1
  %v383 = vsel %vm298, %v382, %v381
  %v384 = vrot.slane %v193, 7
  %v385 = vsel %vm280, %v384, %v192
  %v386 = vrot.slane %v194, 6
  %v387 = vsel %vm283, %v386, %v385
  %v388 = vrot.slane %v195, 5
  %v389 = vsel %vm286, %v388, %v387
  %v390 = vrot.slane %v196, 4
  %v391 = vsel %vm289, %v390, %v389
  %v392 = vrot.slane %v197, 3
  %v393 = vsel %vm292, %v392, %v391
  %v394 = vrot.slane %v198, 2
  %v395 = vsel %vm295, %v394, %v393
  %v396 = vrot.slane %v199, 1
  %v397 = vsel %vm298, %v396, %v395
  %vm398 = vcmask 130048
  %v399 = vsel %vm398, %v299, 0
  %v401 = vsel %vm398, %v313, 0
  %v403 = vsel %vm398, %v327, 0
  %v405 = vsel %vm398, %v341, 0
  %v407 = vsel %vm398, %v355, 0
  %v409 = vsel %vm398, %v369, 0
  %v411 = vsel %vm398, %v383, 0
  %v413 = vsel %vm398, %v397, 0
  %415 = vmatprep.subr.mxu0 0.0
  %416 = vmatpush1.msra.mxu0 %v208
  %417 = vmatprep.subr.mxu0 0.0
  %418 = vmatpush1.msra.mxu0 %v209
  %419 = vmatprep.subr.mxu0 0.0
  %420 = vmatpush1.msra.mxu0 0.0
  %421 = vmatprep.subr.mxu0 0.0
  %422 = vmatpush1.msra.mxu0 0.0
  %423 = vmatprep.subr.mxu0 0.0
  %424 = vmatpush1.msra.mxu0 0.0
  %425 = vmatprep.subr.mxu0 0.0
  %426 = vmatpush1.msra.mxu0 0.0
  %427 = vmatprep.subr.mxu0 0.0
  %428 = vmatpush1.msra.mxu0 0.0
  %429 = vmatprep.subr.mxu0 0.0
  %430 = vmatpush1.msra.mxu0 0.0
  %431 = vmatprep.subr.mxu0 0.0
  %432 = vmatpush1.msra.mxu0 0.0
  %433 = vmatprep.subr.mxu0 0.0
  %434 = vmatpush1.msra.mxu0 0.0
  %435 = vmatprep.subr.mxu0 0.0
  %436 = vmatpush1.msra.mxu0 0.0
  %437 = vmatprep.subr.mxu0 0.0
  %438 = vmatpush1.msra.mxu0 0.0
  %439 = vmatprep.subr.mxu0 0.0
  %440 = vmatpush1.msra.mxu0 0.0
  %441 = vmatprep.subr.mxu0 0.0
  %442 = vmatpush1.msra.mxu0 0.0
  %443 = vmatprep.subr.mxu0 0.0
  %444 = vmatpush1.msra.mxu0 0.0
  %445 = vmatprep.subr.mxu0 0.0
  %446 = vmatpush1.msra.mxu0 0.0
  %447 = vmatprep.subr.mxu0 0.0
  %448 = vmatpush1.msra.mxu0 0.0
  %449 = vmatprep.subr.mxu0 0.0
  %450 = vmatpush1.msra.mxu0 0.0
  %451 = vmatprep.subr.mxu0 0.0
  %452 = vmatpush1.msra.mxu0 0.0
  %453 = vmatprep.subr.mxu0 0.0
  %454 = vmatpush1.msra.mxu0 0.0
  %455 = vmatprep.subr.mxu0 0.0
  %456 = vmatpush1.msra.mxu0 0.0
  %457 = vmatprep.subr.mxu0 0.0
  %458 = vmatpush1.msra.mxu0 0.0
  %459 = vmatprep.subr.mxu0 0.0
  %460 = vmatpush1.msra.mxu0 0.0
  %461 = vmatprep.subr.mxu0 0.0
  %462 = vmatpush1.msra.mxu0 0.0
  %463 = vmatprep.subr.mxu0 0.0
  %464 = vmatpush1.msra.mxu0 0.0
  %465 = vmatprep.subr.mxu0 0.0
  %466 = vmatpush1.msra.mxu0 0.0
  %467 = vmatprep.subr.mxu0 0.0
  %468 = vmatpush1.msra.mxu0 0.0
  %469 = vmatprep.subr.mxu0 0.0
  %470 = vmatpush1.msra.mxu0 0.0
  %471 = vmatprep.subr.mxu0 0.0
  %472 = vmatpush1.msra.mxu0 0.0
  %473 = vmatprep.subr.mxu0 0.0
  %474 = vmatpush1.msra.mxu0 0.0
  %475 = vmatprep.subr.mxu0 0.0
  %476 = vmatpush1.msra.mxu0 0.0
  %477 = vmatprep.subr.mxu0 0.0
  %478 = vmatpush1.msra.mxu0 0.0
  %479 = vmatprep.mubr.f32.mxu0 0.0
  %v480 = vand.u32 %v399, 4294901760
  %v481 = vsub.f32 %v399, %v480
  %v482 = vand.u32 %v481, 4294901760
  %v483 = vsub.f32 %v481, %v482
  %v484 = vand.u32 %v483, 4294901760
  %485 = vmatmul.mubr.f32.gmra.mrb[0].mxu0 %v484
  %v486 = vpop.f32.mrb[0].mxu0
  %v487 = vadd.f32 0.0, %v486
  %v488 = vpop.f32.mrb[0].mxu0
  %489 = vmatprep.mubr.f32.mxu0 0.0
  %v490 = vand.u32 %v401, 4294901760
  %v491 = vsub.f32 %v401, %v490
  %v492 = vand.u32 %v491, 4294901760
  %v493 = vsub.f32 %v491, %v492
  %v494 = vand.u32 %v493, 4294901760
  %495 = vmatmul.mubr.f32.gmra.mrb[0].mxu0 %v494
  %v496 = vpop.f32.mrb[0].mxu0
  %v497 = vadd.f32 0.0, %v496
  %v498 = vpop.f32.mrb[0].mxu0
  %499 = vmatprep.mubr.f32.mxu0 0.0
  %v500 = vand.u32 %v403, 4294901760
  %v501 = vsub.f32 %v403, %v500
  %v502 = vand.u32 %v501, 4294901760
  %v503 = vsub.f32 %v501, %v502
  %v504 = vand.u32 %v503, 4294901760
  %505 = vmatmul.mubr.f32.gmra.mrb[0].mxu0 %v504
  %v506 = vpop.f32.mrb[0].mxu0
  %v507 = vadd.f32 0.0, %v506
  %v508 = vpop.f32.mrb[0].mxu0
  %509 = vmatprep.mubr.f32.mxu0 0.0
  %v510 = vand.u32 %v405, 4294901760
  %v511 = vsub.f32 %v405, %v510
  %v512 = vand.u32 %v511, 4294901760
  %v513 = vsub.f32 %v511, %v512
  %v514 = vand.u32 %v513, 4294901760
  %515 = vmatmul.mubr.f32.gmra.mrb[0].mxu0 %v514
  %v516 = vpop.f32.mrb[0].mxu0
  %v517 = vadd.f32 0.0, %v516
  %v518 = vpop.f32.mrb[0].mxu0
  %519 = vmatprep.mubr.f32.mxu0 0.0
  %v520 = vand.u32 %v407, 4294901760
  %v521 = vsub.f32 %v407, %v520
  %v522 = vand.u32 %v521, 4294901760
  %v523 = vsub.f32 %v521, %v522
  %v524 = vand.u32 %v523, 4294901760
  %525 = vmatmul.mubr.f32.gmra.mrb[0].mxu0 %v524
  %v526 = vpop.f32.mrb[0].mxu0
  %v527 = vadd.f32 0.0, %v526
  %v528 = vpop.f32.mrb[0].mxu0
  %529 = vmatprep.mubr.f32.mxu0 0.0
  %v530 = vand.u32 %v409, 4294901760
  %v531 = vsub.f32 %v409, %v530
  %v532 = vand.u32 %v531, 4294901760
  %v533 = vsub.f32 %v531, %v532
  %v534 = vand.u32 %v533, 4294901760
  %535 = vmatmul.mubr.f32.gmra.mrb[0].mxu0 %v534
  %v536 = vpop.f32.mrb[0].mxu0
  %v537 = vadd.f32 0.0, %v536
  %v538 = vpop.f32.mrb[0].mxu0
  %539 = vmatprep.mubr.f32.mxu0 0.0
  %v540 = vand.u32 %v411, 4294901760
  %v541 = vsub.f32 %v411, %v540
  %v542 = vand.u32 %v541, 4294901760
  %v543 = vsub.f32 %v541, %v542
  %v544 = vand.u32 %v543, 4294901760
  %545 = vmatmul.mubr.f32.gmra.mrb[0].mxu0 %v544
  %v546 = vpop.f32.mrb[0].mxu0
  %v547 = vadd.f32 0.0, %v546
  %v548 = vpop.f32.mrb[0].mxu0
  %549 = vmatprep.mubr.f32.mxu0 0.0
  %v550 = vand.u32 %v413, 4294901760
  %v551 = vsub.f32 %v413, %v550
  %v552 = vand.u32 %v551, 4294901760
  %v553 = vsub.f32 %v551, %v552
  %v554 = vand.u32 %v553, 4294901760
  %555 = vmatmul.mubr.f32.gmra.mrb[0].mxu0 %v554
  %v556 = vpop.f32.mrb[0].mxu0
  %v557 = vadd.f32 0.0, %v556
  %v558 = vpop.f32.mrb[0].mxu0
  %559 = vdwg.mxu0
  %560 = vmatprep.subr.mxu0 0.0
  %v561 = vsub.f32 %v208, %v208
  %v562 = vand.u32 %v561, 4294901760
  %v563 = vsub.f32 %v561, %v562
  %v564 = vand.u32 %v563, 4294901760
  %565 = vmatpush1.msra.mxu0 %v564
  %566 = vmatprep.subr.mxu0 0.0
  %v567 = vsub.f32 %v209, %v209
  %v568 = vand.u32 %v567, 4294901760
  %v569 = vsub.f32 %v567, %v568
  %v570 = vand.u32 %v569, 4294901760
  %571 = vmatpush1.msra.mxu0 %v570
  %572 = vmatprep.subr.mxu0 0.0
  %573 = vmatpush1.msra.mxu0 0.0
  %574 = vmatprep.subr.mxu0 0.0
  %575 = vmatpush1.msra.mxu0 0.0
  %576 = vmatprep.subr.mxu0 0.0
  %577 = vmatpush1.msra.mxu0 0.0
  %578 = vmatprep.subr.mxu0 0.0
  %579 = vmatpush1.msra.mxu0 0.0
  %580 = vmatprep.subr.mxu0 0.0
  %581 = vmatpush1.msra.mxu0 0.0
  %582 = vmatprep.subr.mxu0 0.0
  %583 = vmatpush1.msra.mxu0 0.0
  %584 = vmatprep.subr.mxu0 0.0
  %585 = vmatpush1.msra.mxu0 0.0
  %586 = vmatprep.subr.mxu0 0.0
  %587 = vmatpush1.msra.mxu0 0.0
  %588 = vmatprep.subr.mxu0 0.0
  %589 = vmatpush1.msra.mxu0 0.0
  %590 = vmatprep.subr.mxu0 0.0
  %591 = vmatpush1.msra.mxu0 0.0
  %592 = vmatprep.subr.mxu0 0.0
  %593 = vmatpush1.msra.mxu0 0.0
  %594 = vmatprep.subr.mxu0 0.0
  %595 = vmatpush1.msra.mxu0 0.0
  %596 = vmatprep.subr.mxu0 0.0
  %597 = vmatpush1.msra.mxu0 0.0
  %598 = vmatprep.subr.mxu0 0.0
  %599 = vmatpush1.msra.mxu0 0.0
  %600 = vmatprep.subr.mxu0 0.0
  %601 = vmatpush1.msra.mxu0 0.0
  %602 = vmatprep.subr.mxu0 0.0
  %603 = vmatpush1.msra.mxu0 0.0
  %604 = vmatprep.subr.mxu0 0.0
  %605 = vmatpush1.msra.mxu0 0.0
  %606 = vmatprep.subr.mxu0 0.0
  %607 = vmatpush1.msra.mxu0 0.0
  %608 = vmatprep.subr.mxu0 0.0
  %609 = vmatpush1.msra.mxu0 0.0
  %610 = vmatprep.subr.mxu0 0.0
  %611 = vmatpush1.msra.mxu0 0.0
  %612 = vmatprep.subr.mxu0 0.0
  %613 = vmatpush1.msra.mxu0 0.0
  %614 = vmatprep.subr.mxu0 0.0
  %615 = vmatpush1.msra.mxu0 0.0
  %616 = vmatprep.subr.mxu0 0.0
  %617 = vmatpush1.msra.mxu0 0.0
  %618 = vmatprep.subr.mxu0 0.0
  %619 = vmatpush1.msra.mxu0 0.0
  %620 = vmatprep.subr.mxu0 0.0
  %621 = vmatpush1.msra.mxu0 0.0
  %622 = vmatprep.subr.mxu0 0.0
  %623 = vmatpush1.msra.mxu0 0.0
  %624 = vmatprep.subr.mxu0 0.0
  %625 = vmatpush1.msra.mxu0 0.0
  %626 = vmatprep.subr.mxu0 0.0
  %627 = vmatpush1.msra.mxu0 0.0
  %628 = vmatprep.subr.mxu0 0.0
  %629 = vmatpush1.msra.mxu0 0.0
  %630 = vmatprep.subr.mxu0 0.0
  %631 = vmatpush1.msra.mxu0 0.0
  %632 = vmatprep.mubr.f32.mxu0 0.0
  %v633 = vand.u32 %v399, 4294901760
  %634 = vmatmul.mubr.f32.gmra.mrb[0].mxu0 %v633
  %v635 = vpop.f32.mrb[0].mxu0
  %v636 = vadd.f32 %v487, %v635
  %v637 = vpop.f32.mrb[0].mxu0
  %638 = vmatprep.mubr.f32.mxu0 0.0
  %v639 = vand.u32 %v401, 4294901760
  %640 = vmatmul.mubr.f32.gmra.mrb[0].mxu0 %v639
  %v641 = vpop.f32.mrb[0].mxu0
  %v642 = vadd.f32 %v497, %v641
  %v643 = vpop.f32.mrb[0].mxu0
  %644 = vmatprep.mubr.f32.mxu0 0.0
  %v645 = vand.u32 %v403, 4294901760
  %646 = vmatmul.mubr.f32.gmra.mrb[0].mxu0 %v645
  %v647 = vpop.f32.mrb[0].mxu0
  %v648 = vadd.f32 %v507, %v647
  %v649 = vpop.f32.mrb[0].mxu0
  %650 = vmatprep.mubr.f32.mxu0 0.0
  %v651 = vand.u32 %v405, 4294901760
  %652 = vmatmul.mubr.f32.gmra.mrb[0].mxu0 %v651
  %v653 = vpop.f32.mrb[0].mxu0
  %v654 = vadd.f32 %v517, %v653
  %v655 = vpop.f32.mrb[0].mxu0
  %656 = vmatprep.mubr.f32.mxu0 0.0
  %v657 = vand.u32 %v407, 4294901760
  %658 = vmatmul.mubr.f32.gmra.mrb[0].mxu0 %v657
  %v659 = vpop.f32.mrb[0].mxu0
  %v660 = vadd.f32 %v527, %v659
  %v661 = vpop.f32.mrb[0].mxu0
  %662 = vmatprep.mubr.f32.mxu0 0.0
  %v663 = vand.u32 %v409, 4294901760
  %664 = vmatmul.mubr.f32.gmra.mrb[0].mxu0 %v663
  %v665 = vpop.f32.mrb[0].mxu0
  %v666 = vadd.f32 %v537, %v665
  %v667 = vpop.f32.mrb[0].mxu0
  %668 = vmatprep.mubr.f32.mxu0 0.0
  %v669 = vand.u32 %v411, 4294901760
  %670 = vmatmul.mubr.f32.gmra.mrb[0].mxu0 %v669
  %v671 = vpop.f32.mrb[0].mxu0
  %v672 = vadd.f32 %v547, %v671
  %v673 = vpop.f32.mrb[0].mxu0
  %674 = vmatprep.mubr.f32.mxu0 0.0
  %v675 = vand.u32 %v413, 4294901760
  %676 = vmatmul.mubr.f32.gmra.mrb[0].mxu0 %v675
  %v677 = vpop.f32.mrb[0].mxu0
  %v678 = vadd.f32 %v557, %v677
  %v679 = vpop.f32.mrb[0].mxu0
  %680 = vdwg.mxu0
  %681 = vmatprep.subr.mxu0 0.0
  %v682 = vsub.f32 %v208, %v208
  %683 = vmatpush1.msra.mxu0 %v682
  %684 = vmatprep.subr.mxu0 0.0
  %v685 = vsub.f32 %v209, %v209
  %686 = vmatpush1.msra.mxu0 %v685
  %687 = vmatprep.subr.mxu0 0.0
  %688 = vmatpush1.msra.mxu0 0.0
  %689 = vmatprep.subr.mxu0 0.0
  %690 = vmatpush1.msra.mxu0 0.0
  %691 = vmatprep.subr.mxu0 0.0
  %692 = vmatpush1.msra.mxu0 0.0
  %693 = vmatprep.subr.mxu0 0.0
  %694 = vmatpush1.msra.mxu0 0.0
  %695 = vmatprep.subr.mxu0 0.0
  %696 = vmatpush1.msra.mxu0 0.0
  %697 = vmatprep.subr.mxu0 0.0
  %698 = vmatpush1.msra.mxu0 0.0
  %699 = vmatprep.subr.mxu0 0.0
  %700 = vmatpush1.msra.mxu0 0.0
  %701 = vmatprep.subr.mxu0 0.0
  %702 = vmatpush1.msra.mxu0 0.0
  %703 = vmatprep.subr.mxu0 0.0
  %704 = vmatpush1.msra.mxu0 0.0
  %705 = vmatprep.subr.mxu0 0.0
  %706 = vmatpush1.msra.mxu0 0.0
  %707 = vmatprep.subr.mxu0 0.0
  %708 = vmatpush1.msra.mxu0 0.0
  %709 = vmatprep.subr.mxu0 0.0
  %710 = vmatpush1.msra.mxu0 0.0
  %711 = vmatprep.subr.mxu0 0.0
  %712 = vmatpush1.msra.mxu0 0.0
  %713 = vmatprep.subr.mxu0 0.0
  %714 = vmatpush1.msra.mxu0 0.0
  %715 = vmatprep.subr.mxu0 0.0
  %716 = vmatpush1.msra.mxu0 0.0
  %717 = vmatprep.subr.mxu0 0.0
  %718 = vmatpush1.msra.mxu0 0.0
  %719 = vmatprep.subr.mxu0 0.0
  %720 = vmatpush1.msra.mxu0 0.0
  %721 = vmatprep.subr.mxu0 0.0
  %722 = vmatpush1.msra.mxu0 0.0
  %723 = vmatprep.subr.mxu0 0.0
  %724 = vmatpush1.msra.mxu0 0.0
  %725 = vmatprep.subr.mxu0 0.0
  %726 = vmatpush1.msra.mxu0 0.0
  %727 = vmatprep.subr.mxu0 0.0
  %728 = vmatpush1.msra.mxu0 0.0
  %729 = vmatprep.subr.mxu0 0.0
  %730 = vmatpush1.msra.mxu0 0.0
  %731 = vmatprep.subr.mxu0 0.0
  %732 = vmatpush1.msra.mxu0 0.0
  %733 = vmatprep.subr.mxu0 0.0
  %734 = vmatpush1.msra.mxu0 0.0
  %735 = vmatprep.subr.mxu0 0.0
  %736 = vmatpush1.msra.mxu0 0.0
  %737 = vmatprep.subr.mxu0 0.0
  %738 = vmatpush1.msra.mxu0 0.0
  %739 = vmatprep.subr.mxu0 0.0
  %740 = vmatpush1.msra.mxu0 0.0
  %741 = vmatprep.subr.mxu0 0.0
  %742 = vmatpush1.msra.mxu0 0.0
  %743 = vmatprep.subr.mxu0 0.0
  %744 = vmatpush1.msra.mxu0 0.0
  %745 = vmatprep.subr.mxu0 0.0
  %746 = vmatpush1.msra.mxu0 0.0
  %747 = vmatprep.mubr.f32.mxu0 0.0
  %v748 = vand.u32 %v399, 4294901760
  %v749 = vsub.f32 %v399, %v748
  %750 = vmatmul.mubr.f32.gmra.mrb[0].mxu0 %v749
  %v751 = vpop.f32.mrb[0].mxu0
  %v752 = vadd.f32 %v636, %v751
  %v753 = vpop.f32.mrb[0].mxu0
  %754 = vmatprep.mubr.f32.mxu0 0.0
  %v755 = vand.u32 %v401, 4294901760
  %v756 = vsub.f32 %v401, %v755
  %757 = vmatmul.mubr.f32.gmra.mrb[0].mxu0 %v756
  %v758 = vpop.f32.mrb[0].mxu0
  %v759 = vadd.f32 %v642, %v758
  %v760 = vpop.f32.mrb[0].mxu0
  %761 = vmatprep.mubr.f32.mxu0 0.0
  %v762 = vand.u32 %v403, 4294901760
  %v763 = vsub.f32 %v403, %v762
  %764 = vmatmul.mubr.f32.gmra.mrb[0].mxu0 %v763
  %v765 = vpop.f32.mrb[0].mxu0
  %v766 = vadd.f32 %v648, %v765
  %v767 = vpop.f32.mrb[0].mxu0
  %768 = vmatprep.mubr.f32.mxu0 0.0
  %v769 = vand.u32 %v405, 4294901760
  %v770 = vsub.f32 %v405, %v769
  %771 = vmatmul.mubr.f32.gmra.mrb[0].mxu0 %v770
  %v772 = vpop.f32.mrb[0].mxu0
  %v773 = vadd.f32 %v654, %v772
  %v774 = vpop.f32.mrb[0].mxu0
  %775 = vmatprep.mubr.f32.mxu0 0.0
  %v776 = vand.u32 %v407, 4294901760
  %v777 = vsub.f32 %v407, %v776
  %778 = vmatmul.mubr.f32.gmra.mrb[0].mxu0 %v777
  %v779 = vpop.f32.mrb[0].mxu0
  %v780 = vadd.f32 %v660, %v779
  %v781 = vpop.f32.mrb[0].mxu0
  %782 = vmatprep.mubr.f32.mxu0 0.0
  %v783 = vand.u32 %v409, 4294901760
  %v784 = vsub.f32 %v409, %v783
  %785 = vmatmul.mubr.f32.gmra.mrb[0].mxu0 %v784
  %v786 = vpop.f32.mrb[0].mxu0
  %v787 = vadd.f32 %v666, %v786
  %v788 = vpop.f32.mrb[0].mxu0
  %789 = vmatprep.mubr.f32.mxu0 0.0
  %v790 = vand.u32 %v411, 4294901760
  %v791 = vsub.f32 %v411, %v790
  %792 = vmatmul.mubr.f32.gmra.mrb[0].mxu0 %v791
  %v793 = vpop.f32.mrb[0].mxu0
  %v794 = vadd.f32 %v672, %v793
  %v795 = vpop.f32.mrb[0].mxu0
  %796 = vmatprep.mubr.f32.mxu0 0.0
  %v797 = vand.u32 %v413, 4294901760
  %v798 = vsub.f32 %v413, %v797
  %799 = vmatmul.mubr.f32.gmra.mrb[0].mxu0 %v798
  %v800 = vpop.f32.mrb[0].mxu0
  %v801 = vadd.f32 %v678, %v800
  %v802 = vpop.f32.mrb[0].mxu0
  %803 = vdwg.mxu0
  %804 = vmatprep.subr.mxu0 0.0
  %805 = vmatpush1.msra.mxu0 %v208
  %806 = vmatprep.subr.mxu0 0.0
  %807 = vmatpush1.msra.mxu0 %v209
  %808 = vmatprep.subr.mxu0 0.0
  %809 = vmatpush1.msra.mxu0 0.0
  %810 = vmatprep.subr.mxu0 0.0
  %811 = vmatpush1.msra.mxu0 0.0
  %812 = vmatprep.subr.mxu0 0.0
  %813 = vmatpush1.msra.mxu0 0.0
  %814 = vmatprep.subr.mxu0 0.0
  %815 = vmatpush1.msra.mxu0 0.0
  %816 = vmatprep.subr.mxu0 0.0
  %817 = vmatpush1.msra.mxu0 0.0
  %818 = vmatprep.subr.mxu0 0.0
  %819 = vmatpush1.msra.mxu0 0.0
  %820 = vmatprep.subr.mxu0 0.0
  %821 = vmatpush1.msra.mxu0 0.0
  %822 = vmatprep.subr.mxu0 0.0
  %823 = vmatpush1.msra.mxu0 0.0
  %824 = vmatprep.subr.mxu0 0.0
  %825 = vmatpush1.msra.mxu0 0.0
  %826 = vmatprep.subr.mxu0 0.0
  %827 = vmatpush1.msra.mxu0 0.0
  %828 = vmatprep.subr.mxu0 0.0
  %829 = vmatpush1.msra.mxu0 0.0
  %830 = vmatprep.subr.mxu0 0.0
  %831 = vmatpush1.msra.mxu0 0.0
  %832 = vmatprep.subr.mxu0 0.0
  %833 = vmatpush1.msra.mxu0 0.0
  %834 = vmatprep.subr.mxu0 0.0
  %835 = vmatpush1.msra.mxu0 0.0
  %836 = vmatprep.subr.mxu0 0.0
  %837 = vmatpush1.msra.mxu0 0.0
  %838 = vmatprep.subr.mxu0 0.0
  %839 = vmatpush1.msra.mxu0 0.0
  %840 = vmatprep.subr.mxu0 0.0
  %841 = vmatpush1.msra.mxu0 0.0
  %842 = vmatprep.subr.mxu0 0.0
  %843 = vmatpush1.msra.mxu0 0.0
  %844 = vmatprep.subr.mxu0 0.0
  %845 = vmatpush1.msra.mxu0 0.0
  %846 = vmatprep.subr.mxu0 0.0
  %847 = vmatpush1.msra.mxu0 0.0
  %848 = vmatprep.subr.mxu0 0.0
  %849 = vmatpush1.msra.mxu0 0.0
  %850 = vmatprep.subr.mxu0 0.0
  %851 = vmatpush1.msra.mxu0 0.0
  %852 = vmatprep.subr.mxu0 0.0
  %853 = vmatpush1.msra.mxu0 0.0
  %854 = vmatprep.subr.mxu0 0.0
  %855 = vmatpush1.msra.mxu0 0.0
  %856 = vmatprep.subr.mxu0 0.0
  %857 = vmatpush1.msra.mxu0 0.0
  %858 = vmatprep.subr.mxu0 0.0
  %859 = vmatpush1.msra.mxu0 0.0
  %860 = vmatprep.subr.mxu0 0.0
  %861 = vmatpush1.msra.mxu0 0.0
  %862 = vmatprep.subr.mxu0 0.0
  %863 = vmatpush1.msra.mxu0 0.0
  %864 = vmatprep.subr.mxu0 0.0
  %865 = vmatpush1.msra.mxu0 0.0
  %866 = vmatprep.subr.mxu0 0.0
  %867 = vmatpush1.msra.mxu0 0.0
  %868 = vmatprep.mubr.f32.mxu0 0.0
  %v869 = vand.u32 %v399, 4294901760
  %v870 = vsub.f32 %v399, %v869
  %v871 = vand.u32 %v870, 4294901760
  %872 = vmatmul.mubr.f32.gmra.mrb[0].mxu0 %v871
  %v873 = vpop.f32.mrb[0].mxu0
  %v874 = vadd.f32 %v752, %v873
  %v875 = vpop.f32.mrb[0].mxu0
  %876 = vmatprep.mubr.f32.mxu0 0.0
  %v877 = vand.u32 %v401, 4294901760
  %v878 = vsub.f32 %v401, %v877
  %v879 = vand.u32 %v878, 4294901760
  %880 = vmatmul.mubr.f32.gmra.mrb[0].mxu0 %v879
  %v881 = vpop.f32.mrb[0].mxu0
  %v882 = vadd.f32 %v759, %v881
  %v883 = vpop.f32.mrb[0].mxu0
  %884 = vmatprep.mubr.f32.mxu0 0.0
  %v885 = vand.u32 %v403, 4294901760
  %v886 = vsub.f32 %v403, %v885
  %v887 = vand.u32 %v886, 4294901760
  %888 = vmatmul.mubr.f32.gmra.mrb[0].mxu0 %v887
  %v889 = vpop.f32.mrb[0].mxu0
  %v890 = vadd.f32 %v766, %v889
  %v891 = vpop.f32.mrb[0].mxu0
  %892 = vmatprep.mubr.f32.mxu0 0.0
  %v893 = vand.u32 %v405, 4294901760
  %v894 = vsub.f32 %v405, %v893
  %v895 = vand.u32 %v894, 4294901760
  %896 = vmatmul.mubr.f32.gmra.mrb[0].mxu0 %v895
  %v897 = vpop.f32.mrb[0].mxu0
  %v898 = vadd.f32 %v773, %v897
  %v899 = vpop.f32.mrb[0].mxu0
  %900 = vmatprep.mubr.f32.mxu0 0.0
  %v901 = vand.u32 %v407, 4294901760
  %v902 = vsub.f32 %v407, %v901
  %v903 = vand.u32 %v902, 4294901760
  %904 = vmatmul.mubr.f32.gmra.mrb[0].mxu0 %v903
  %v905 = vpop.f32.mrb[0].mxu0
  %v906 = vadd.f32 %v780, %v905
  %v907 = vpop.f32.mrb[0].mxu0
  %908 = vmatprep.mubr.f32.mxu0 0.0
  %v909 = vand.u32 %v409, 4294901760
  %v910 = vsub.f32 %v409, %v909
  %v911 = vand.u32 %v910, 4294901760
  %912 = vmatmul.mubr.f32.gmra.mrb[0].mxu0 %v911
  %v913 = vpop.f32.mrb[0].mxu0
  %v914 = vadd.f32 %v787, %v913
  %v915 = vpop.f32.mrb[0].mxu0
  %916 = vmatprep.mubr.f32.mxu0 0.0
  %v917 = vand.u32 %v411, 4294901760
  %v918 = vsub.f32 %v411, %v917
  %v919 = vand.u32 %v918, 4294901760
  %920 = vmatmul.mubr.f32.gmra.mrb[0].mxu0 %v919
  %v921 = vpop.f32.mrb[0].mxu0
  %v922 = vadd.f32 %v794, %v921
  %v923 = vpop.f32.mrb[0].mxu0
  %924 = vmatprep.mubr.f32.mxu0 0.0
  %v925 = vand.u32 %v413, 4294901760
  %v926 = vsub.f32 %v413, %v925
  %v927 = vand.u32 %v926, 4294901760
  %928 = vmatmul.mubr.f32.gmra.mrb[0].mxu0 %v927
  %v929 = vpop.f32.mrb[0].mxu0
  %v930 = vadd.f32 %v801, %v929
  %v931 = vpop.f32.mrb[0].mxu0
  %932 = vdwg.mxu0
  %933 = vmatprep.subr.mxu0 0.0
  %v934 = vsub.f32 %v208, %v208
  %v935 = vand.u32 %v934, 4294901760
  %936 = vmatpush1.msra.mxu0 %v935
  %937 = vmatprep.subr.mxu0 0.0
  %v938 = vsub.f32 %v209, %v209
  %v939 = vand.u32 %v938, 4294901760
  %940 = vmatpush1.msra.mxu0 %v939
  %941 = vmatprep.subr.mxu0 0.0
  %942 = vmatpush1.msra.mxu0 0.0
  %943 = vmatprep.subr.mxu0 0.0
  %944 = vmatpush1.msra.mxu0 0.0
  %945 = vmatprep.subr.mxu0 0.0
  %946 = vmatpush1.msra.mxu0 0.0
  %947 = vmatprep.subr.mxu0 0.0
  %948 = vmatpush1.msra.mxu0 0.0
  %949 = vmatprep.subr.mxu0 0.0
  %950 = vmatpush1.msra.mxu0 0.0
  %951 = vmatprep.subr.mxu0 0.0
  %952 = vmatpush1.msra.mxu0 0.0
  %953 = vmatprep.subr.mxu0 0.0
  %954 = vmatpush1.msra.mxu0 0.0
  %955 = vmatprep.subr.mxu0 0.0
  %956 = vmatpush1.msra.mxu0 0.0
  %957 = vmatprep.subr.mxu0 0.0
  %958 = vmatpush1.msra.mxu0 0.0
  %959 = vmatprep.subr.mxu0 0.0
  %960 = vmatpush1.msra.mxu0 0.0
  %961 = vmatprep.subr.mxu0 0.0
  %962 = vmatpush1.msra.mxu0 0.0
  %963 = vmatprep.subr.mxu0 0.0
  %964 = vmatpush1.msra.mxu0 0.0
  %965 = vmatprep.subr.mxu0 0.0
  %966 = vmatpush1.msra.mxu0 0.0
  %967 = vmatprep.subr.mxu0 0.0
  %968 = vmatpush1.msra.mxu0 0.0
  %969 = vmatprep.subr.mxu0 0.0
  %970 = vmatpush1.msra.mxu0 0.0
  %971 = vmatprep.subr.mxu0 0.0
  %972 = vmatpush1.msra.mxu0 0.0
  %973 = vmatprep.subr.mxu0 0.0
  %974 = vmatpush1.msra.mxu0 0.0
  %975 = vmatprep.subr.mxu0 0.0
  %976 = vmatpush1.msra.mxu0 0.0
  %977 = vmatprep.subr.mxu0 0.0
  %978 = vmatpush1.msra.mxu0 0.0
  %979 = vmatprep.subr.mxu0 0.0
  %980 = vmatpush1.msra.mxu0 0.0
  %981 = vmatprep.subr.mxu0 0.0
  %982 = vmatpush1.msra.mxu0 0.0
  %983 = vmatprep.subr.mxu0 0.0
  %984 = vmatpush1.msra.mxu0 0.0
  %985 = vmatprep.subr.mxu0 0.0
  %986 = vmatpush1.msra.mxu0 0.0
  %987 = vmatprep.subr.mxu0 0.0
  %988 = vmatpush1.msra.mxu0 0.0
  %989 = vmatprep.subr.mxu0 0.0
  %990 = vmatpush1.msra.mxu0 0.0
  %991 = vmatprep.subr.mxu0 0.0
  %992 = vmatpush1.msra.mxu0 0.0
  %993 = vmatprep.subr.mxu0 0.0
  %994 = vmatpush1.msra.mxu0 0.0
  %995 = vmatprep.subr.mxu0 0.0
  %996 = vmatpush1.msra.mxu0 0.0
  %997 = vmatprep.subr.mxu0 0.0
  %998 = vmatpush1.msra.mxu0 0.0
  %999 = vmatprep.subr.mxu0 0.0
  %1000 = vmatpush1.msra.mxu0 0.0
  %1001 = vmatprep.mubr.f32.mxu0 0.0
  %v1002 = vand.u32 %v399, 4294901760
  %1003 = vmatmul.mubr.f32.gmra.mrb[0].mxu0 %v1002
  %v1004 = vpop.f32.mrb[0].mxu0
  %v1005 = vadd.f32 %v874, %v1004
  %v1006 = vpop.f32.mrb[0].mxu0
  %1007 = vmatprep.mubr.f32.mxu0 0.0
  %v1008 = vand.u32 %v401, 4294901760
  %1009 = vmatmul.mubr.f32.gmra.mrb[0].mxu0 %v1008
  %v1010 = vpop.f32.mrb[0].mxu0
  %v1011 = vadd.f32 %v882, %v1010
  %v1012 = vpop.f32.mrb[0].mxu0
  %1013 = vmatprep.mubr.f32.mxu0 0.0
  %v1014 = vand.u32 %v403, 4294901760
  %1015 = vmatmul.mubr.f32.gmra.mrb[0].mxu0 %v1014
  %v1016 = vpop.f32.mrb[0].mxu0
  %v1017 = vadd.f32 %v890, %v1016
  %v1018 = vpop.f32.mrb[0].mxu0
  %1019 = vmatprep.mubr.f32.mxu0 0.0
  %v1020 = vand.u32 %v405, 4294901760
  %1021 = vmatmul.mubr.f32.gmra.mrb[0].mxu0 %v1020
  %v1022 = vpop.f32.mrb[0].mxu0
  %v1023 = vadd.f32 %v898, %v1022
  %v1024 = vpop.f32.mrb[0].mxu0
  %1025 = vmatprep.mubr.f32.mxu0 0.0
  %v1026 = vand.u32 %v407, 4294901760
  %1027 = vmatmul.mubr.f32.gmra.mrb[0].mxu0 %v1026
  %v1028 = vpop.f32.mrb[0].mxu0
  %v1029 = vadd.f32 %v906, %v1028
  %v1030 = vpop.f32.mrb[0].mxu0
  %1031 = vmatprep.mubr.f32.mxu0 0.0
  %v1032 = vand.u32 %v409, 4294901760
  %1033 = vmatmul.mubr.f32.gmra.mrb[0].mxu0 %v1032
  %v1034 = vpop.f32.mrb[0].mxu0
  %v1035 = vadd.f32 %v914, %v1034
  %v1036 = vpop.f32.mrb[0].mxu0
  %1037 = vmatprep.mubr.f32.mxu0 0.0
  %v1038 = vand.u32 %v411, 4294901760
  %1039 = vmatmul.mubr.f32.gmra.mrb[0].mxu0 %v1038
  %v1040 = vpop.f32.mrb[0].mxu0
  %v1041 = vadd.f32 %v922, %v1040
  %v1042 = vpop.f32.mrb[0].mxu0
  %1043 = vmatprep.mubr.f32.mxu0 0.0
  %v1044 = vand.u32 %v413, 4294901760
  %1045 = vmatmul.mubr.f32.gmra.mrb[0].mxu0 %v1044
  %v1046 = vpop.f32.mrb[0].mxu0
  %v1047 = vadd.f32 %v930, %v1046
  %v1048 = vpop.f32.mrb[0].mxu0
  %1049 = vdwg.mxu0
  %1050 = vmatprep.subr.mxu0 0.0
  %1051 = vmatpush1.msra.mxu0 %v208
  %1052 = vmatprep.subr.mxu0 0.0
  %1053 = vmatpush1.msra.mxu0 %v209
  %1054 = vmatprep.subr.mxu0 0.0
  %1055 = vmatpush1.msra.mxu0 0.0
  %1056 = vmatprep.subr.mxu0 0.0
  %1057 = vmatpush1.msra.mxu0 0.0
  %1058 = vmatprep.subr.mxu0 0.0
  %1059 = vmatpush1.msra.mxu0 0.0
  %1060 = vmatprep.subr.mxu0 0.0
  %1061 = vmatpush1.msra.mxu0 0.0
  %1062 = vmatprep.subr.mxu0 0.0
  %1063 = vmatpush1.msra.mxu0 0.0
  %1064 = vmatprep.subr.mxu0 0.0
  %1065 = vmatpush1.msra.mxu0 0.0
  %1066 = vmatprep.subr.mxu0 0.0
  %1067 = vmatpush1.msra.mxu0 0.0
  %1068 = vmatprep.subr.mxu0 0.0
  %1069 = vmatpush1.msra.mxu0 0.0
  %1070 = vmatprep.subr.mxu0 0.0
  %1071 = vmatpush1.msra.mxu0 0.0
  %1072 = vmatprep.subr.mxu0 0.0
  %1073 = vmatpush1.msra.mxu0 0.0
  %1074 = vmatprep.subr.mxu0 0.0
  %1075 = vmatpush1.msra.mxu0 0.0
  %1076 = vmatprep.subr.mxu0 0.0
  %1077 = vmatpush1.msra.mxu0 0.0
  %1078 = vmatprep.subr.mxu0 0.0
  %1079 = vmatpush1.msra.mxu0 0.0
  %1080 = vmatprep.subr.mxu0 0.0
  %1081 = vmatpush1.msra.mxu0 0.0
  %1082 = vmatprep.subr.mxu0 0.0
  %1083 = vmatpush1.msra.mxu0 0.0
  %1084 = vmatprep.subr.mxu0 0.0
  %1085 = vmatpush1.msra.mxu0 0.0
  %1086 = vmatprep.subr.mxu0 0.0
  %1087 = vmatpush1.msra.mxu0 0.0
  %1088 = vmatprep.subr.mxu0 0.0
  %1089 = vmatpush1.msra.mxu0 0.0
  %1090 = vmatprep.subr.mxu0 0.0
  %1091 = vmatpush1.msra.mxu0 0.0
  %1092 = vmatprep.subr.mxu0 0.0
  %1093 = vmatpush1.msra.mxu0 0.0
  %1094 = vmatprep.subr.mxu0 0.0
  %1095 = vmatpush1.msra.mxu0 0.0
  %1096 = vmatprep.subr.mxu0 0.0
  %1097 = vmatpush1.msra.mxu0 0.0
  %1098 = vmatprep.subr.mxu0 0.0
  %1099 = vmatpush1.msra.mxu0 0.0
  %1100 = vmatprep.subr.mxu0 0.0
  %1101 = vmatpush1.msra.mxu0 0.0
  %1102 = vmatprep.subr.mxu0 0.0
  %1103 = vmatpush1.msra.mxu0 0.0
  %1104 = vmatprep.subr.mxu0 0.0
  %1105 = vmatpush1.msra.mxu0 0.0
  %1106 = vmatprep.subr.mxu0 0.0
  %1107 = vmatpush1.msra.mxu0 0.0
  %1108 = vmatprep.subr.mxu0 0.0
  %1109 = vmatpush1.msra.mxu0 0.0
  %1110 = vmatprep.subr.mxu0 0.0
  %1111 = vmatpush1.msra.mxu0 0.0
  %1112 = vmatprep.subr.mxu0 0.0
  %1113 = vmatpush1.msra.mxu0 0.0
  %1114 = vmatprep.mubr.f32.mxu0 0.0
  %v1115 = vand.u32 %v399, 4294901760
  %1116 = vmatmul.mubr.f32.gmra.mrb[0].mxu0 %v1115
  %v1117 = vpop.f32.mrb[0].mxu0
  %v1118 = vadd.f32 %v1005, %v1117
  %v1119 = vpop.f32.mrb[0].mxu0
  %1120 = vmatprep.mubr.f32.mxu0 0.0
  %v1121 = vand.u32 %v401, 4294901760
  %1122 = vmatmul.mubr.f32.gmra.mrb[0].mxu0 %v1121
  %v1123 = vpop.f32.mrb[0].mxu0
  %v1124 = vadd.f32 %v1011, %v1123
  %v1125 = vpop.f32.mrb[0].mxu0
  %1126 = vmatprep.mubr.f32.mxu0 0.0
  %v1127 = vand.u32 %v403, 4294901760
  %1128 = vmatmul.mubr.f32.gmra.mrb[0].mxu0 %v1127
  %v1129 = vpop.f32.mrb[0].mxu0
  %v1130 = vadd.f32 %v1017, %v1129
  %v1131 = vpop.f32.mrb[0].mxu0
  %1132 = vmatprep.mubr.f32.mxu0 0.0
  %v1133 = vand.u32 %v405, 4294901760
  %1134 = vmatmul.mubr.f32.gmra.mrb[0].mxu0 %v1133
  %v1135 = vpop.f32.mrb[0].mxu0
  %v1136 = vadd.f32 %v1023, %v1135
  %v1137 = vpop.f32.mrb[0].mxu0
  %1138 = vmatprep.mubr.f32.mxu0 0.0
  %v1139 = vand.u32 %v407, 4294901760
  %1140 = vmatmul.mubr.f32.gmra.mrb[0].mxu0 %v1139
  %v1141 = vpop.f32.mrb[0].mxu0
  %v1142 = vadd.f32 %v1029, %v1141
  %v1143 = vpop.f32.mrb[0].mxu0
  %1144 = vmatprep.mubr.f32.mxu0 0.0
  %v1145 = vand.u32 %v409, 4294901760
  %1146 = vmatmul.mubr.f32.gmra.mrb[0].mxu0 %v1145
  %v1147 = vpop.f32.mrb[0].mxu0
  %v1148 = vadd.f32 %v1035, %v1147
  %v1149 = vpop.f32.mrb[0].mxu0
  %1150 = vmatprep.mubr.f32.mxu0 0.0
  %v1151 = vand.u32 %v411, 4294901760
  %1152 = vmatmul.mubr.f32.gmra.mrb[0].mxu0 %v1151
  %v1153 = vpop.f32.mrb[0].mxu0
  %v1154 = vadd.f32 %v1041, %v1153
  %v1155 = vpop.f32.mrb[0].mxu0
  %1156 = vmatprep.mubr.f32.mxu0 0.0
  %v1157 = vand.u32 %v413, 4294901760
  %1158 = vmatmul.mubr.f32.gmra.mrb[0].mxu0 %v1157
  %v1159 = vpop.f32.mrb[0].mxu0
  %v1160 = vadd.f32 %v1047, %v1159
  %v1161 = vpop.f32.mrb[0].mxu0
  %1162 = vdwg.mxu0
  %1163 = vmatprep.subr.mxu0 0.0
  %1164 = vmatpush1.msra.mxu0 %v213
  %1165 = vmatprep.subr.mxu0 0.0
  %1166 = vmatpush1.msra.mxu0 %v214
  %1167 = vmatprep.subr.mxu0 0.0
  %1168 = vmatpush1.msra.mxu0 0.0
  %1169 = vmatprep.subr.mxu0 0.0
  %1170 = vmatpush1.msra.mxu0 0.0
  %1171 = vmatprep.subr.mxu0 0.0
  %1172 = vmatpush1.msra.mxu0 0.0
  %1173 = vmatprep.subr.mxu0 0.0
  %1174 = vmatpush1.msra.mxu0 0.0
  %1175 = vmatprep.subr.mxu0 0.0
  %1176 = vmatpush1.msra.mxu0 0.0
  %1177 = vmatprep.subr.mxu0 0.0
  %1178 = vmatpush1.msra.mxu0 0.0
  %1179 = vmatprep.subr.mxu0 0.0
  %1180 = vmatpush1.msra.mxu0 0.0
  %1181 = vmatprep.subr.mxu0 0.0
  %1182 = vmatpush1.msra.mxu0 0.0
  %1183 = vmatprep.subr.mxu0 0.0
  %1184 = vmatpush1.msra.mxu0 0.0
  %1185 = vmatprep.subr.mxu0 0.0
  %1186 = vmatpush1.msra.mxu0 0.0
  %1187 = vmatprep.subr.mxu0 0.0
  %1188 = vmatpush1.msra.mxu0 0.0
  %1189 = vmatprep.subr.mxu0 0.0
  %1190 = vmatpush1.msra.mxu0 0.0
  %1191 = vmatprep.subr.mxu0 0.0
  %1192 = vmatpush1.msra.mxu0 0.0
  %1193 = vmatprep.subr.mxu0 0.0
  %1194 = vmatpush1.msra.mxu0 0.0
  %1195 = vmatprep.subr.mxu0 0.0
  %1196 = vmatpush1.msra.mxu0 0.0
  %1197 = vmatprep.subr.mxu0 0.0
  %1198 = vmatpush1.msra.mxu0 0.0
  %1199 = vmatprep.subr.mxu0 0.0
  %1200 = vmatpush1.msra.mxu0 0.0
  %1201 = vmatprep.subr.mxu0 0.0
  %1202 = vmatpush1.msra.mxu0 0.0
  %1203 = vmatprep.subr.mxu0 0.0
  %1204 = vmatpush1.msra.mxu0 0.0
  %1205 = vmatprep.subr.mxu0 0.0
  %1206 = vmatpush1.msra.mxu0 0.0
  %1207 = vmatprep.subr.mxu0 0.0
  %1208 = vmatpush1.msra.mxu0 0.0
  %1209 = vmatprep.subr.mxu0 0.0
  %1210 = vmatpush1.msra.mxu0 0.0
  %1211 = vmatprep.subr.mxu0 0.0
  %1212 = vmatpush1.msra.mxu0 0.0
  %1213 = vmatprep.subr.mxu0 0.0
  %1214 = vmatpush1.msra.mxu0 0.0
  %1215 = vmatprep.subr.mxu0 0.0
  %1216 = vmatpush1.msra.mxu0 0.0
  %1217 = vmatprep.subr.mxu0 0.0
  %1218 = vmatpush1.msra.mxu0 0.0
  %1219 = vmatprep.subr.mxu0 0.0
  %1220 = vmatpush1.msra.mxu0 0.0
  %1221 = vmatprep.subr.mxu0 0.0
  %1222 = vmatpush1.msra.mxu0 0.0
  %1223 = vmatprep.subr.mxu0 0.0
  %1224 = vmatpush1.msra.mxu0 0.0
  %1225 = vmatprep.subr.mxu0 0.0
  %1226 = vmatpush1.msra.mxu0 0.0
  %1227 = vmatprep.mubr.f32.mxu0 0.0
  %v1228 = vand.u32 %v399, 4294901760
  %v1229 = vsub.f32 %v399, %v1228
  %v1230 = vand.u32 %v1229, 4294901760
  %v1231 = vsub.f32 %v1229, %v1230
  %v1232 = vand.u32 %v1231, 4294901760
  %1233 = vmatmul.mubr.f32.gmra.mrb[0].mxu0 %v1232
  %v1234 = vpop.f32.mrb[0].mxu0
  %v1235 = vadd.f32 0.0, %v1234
  %v1236 = vpop.f32.mrb[0].mxu0
  %1237 = vmatprep.mubr.f32.mxu0 0.0
  %v1238 = vand.u32 %v401, 4294901760
  %v1239 = vsub.f32 %v401, %v1238
  %v1240 = vand.u32 %v1239, 4294901760
  %v1241 = vsub.f32 %v1239, %v1240
  %v1242 = vand.u32 %v1241, 4294901760
  %1243 = vmatmul.mubr.f32.gmra.mrb[0].mxu0 %v1242
  %v1244 = vpop.f32.mrb[0].mxu0
  %v1245 = vadd.f32 0.0, %v1244
  %v1246 = vpop.f32.mrb[0].mxu0
  %1247 = vmatprep.mubr.f32.mxu0 0.0
  %v1248 = vand.u32 %v403, 4294901760
  %v1249 = vsub.f32 %v403, %v1248
  %v1250 = vand.u32 %v1249, 4294901760
  %v1251 = vsub.f32 %v1249, %v1250
  %v1252 = vand.u32 %v1251, 4294901760
  %1253 = vmatmul.mubr.f32.gmra.mrb[0].mxu0 %v1252
  %v1254 = vpop.f32.mrb[0].mxu0
  %v1255 = vadd.f32 0.0, %v1254
  %v1256 = vpop.f32.mrb[0].mxu0
  %1257 = vmatprep.mubr.f32.mxu0 0.0
  %v1258 = vand.u32 %v405, 4294901760
  %v1259 = vsub.f32 %v405, %v1258
  %v1260 = vand.u32 %v1259, 4294901760
  %v1261 = vsub.f32 %v1259, %v1260
  %v1262 = vand.u32 %v1261, 4294901760
  %1263 = vmatmul.mubr.f32.gmra.mrb[0].mxu0 %v1262
  %v1264 = vpop.f32.mrb[0].mxu0
  %v1265 = vadd.f32 0.0, %v1264
  %v1266 = vpop.f32.mrb[0].mxu0
  %1267 = vmatprep.mubr.f32.mxu0 0.0
  %v1268 = vand.u32 %v407, 4294901760
  %v1269 = vsub.f32 %v407, %v1268
  %v1270 = vand.u32 %v1269, 4294901760
  %v1271 = vsub.f32 %v1269, %v1270
  %v1272 = vand.u32 %v1271, 4294901760
  %1273 = vmatmul.mubr.f32.gmra.mrb[0].mxu0 %v1272
  %v1274 = vpop.f32.mrb[0].mxu0
  %v1275 = vadd.f32 0.0, %v1274
  %v1276 = vpop.f32.mrb[0].mxu0
  %1277 = vmatprep.mubr.f32.mxu0 0.0
  %v1278 = vand.u32 %v409, 4294901760
  %v1279 = vsub.f32 %v409, %v1278
  %v1280 = vand.u32 %v1279, 4294901760
  %v1281 = vsub.f32 %v1279, %v1280
  %v1282 = vand.u32 %v1281, 4294901760
  %1283 = vmatmul.mubr.f32.gmra.mrb[0].mxu0 %v1282
  %v1284 = vpop.f32.mrb[0].mxu0
  %v1285 = vadd.f32 0.0, %v1284
  %v1286 = vpop.f32.mrb[0].mxu0
  %1287 = vmatprep.mubr.f32.mxu0 0.0
  %v1288 = vand.u32 %v411, 4294901760
  %v1289 = vsub.f32 %v411, %v1288
  %v1290 = vand.u32 %v1289, 4294901760
  %v1291 = vsub.f32 %v1289, %v1290
  %v1292 = vand.u32 %v1291, 4294901760
  %1293 = vmatmul.mubr.f32.gmra.mrb[0].mxu0 %v1292
  %v1294 = vpop.f32.mrb[0].mxu0
  %v1295 = vadd.f32 0.0, %v1294
  %v1296 = vpop.f32.mrb[0].mxu0
  %1297 = vmatprep.mubr.f32.mxu0 0.0
  %v1298 = vand.u32 %v413, 4294901760
  %v1299 = vsub.f32 %v413, %v1298
  %v1300 = vand.u32 %v1299, 4294901760
  %v1301 = vsub.f32 %v1299, %v1300
  %v1302 = vand.u32 %v1301, 4294901760
  %1303 = vmatmul.mubr.f32.gmra.mrb[0].mxu0 %v1302
  %v1304 = vpop.f32.mrb[0].mxu0
  %v1305 = vadd.f32 0.0, %v1304
  %v1306 = vpop.f32.mrb[0].mxu0
  %1307 = vdwg.mxu0
  %1308 = vmatprep.subr.mxu0 0.0
  %v1309 = vsub.f32 %v213, %v213
  %v1310 = vand.u32 %v1309, 4294901760
  %v1311 = vsub.f32 %v1309, %v1310
  %v1312 = vand.u32 %v1311, 4294901760
  %1313 = vmatpush1.msra.mxu0 %v1312
  %1314 = vmatprep.subr.mxu0 0.0
  %v1315 = vsub.f32 %v214, %v214
  %v1316 = vand.u32 %v1315, 4294901760
  %v1317 = vsub.f32 %v1315, %v1316
  %v1318 = vand.u32 %v1317, 4294901760
  %1319 = vmatpush1.msra.mxu0 %v1318
  %1320 = vmatprep.subr.mxu0 0.0
  %1321 = vmatpush1.msra.mxu0 0.0
  %1322 = vmatprep.subr.mxu0 0.0
  %1323 = vmatpush1.msra.mxu0 0.0
  %1324 = vmatprep.subr.mxu0 0.0
  %1325 = vmatpush1.msra.mxu0 0.0
  %1326 = vmatprep.subr.mxu0 0.0
  %1327 = vmatpush1.msra.mxu0 0.0
  %1328 = vmatprep.subr.mxu0 0.0
  %1329 = vmatpush1.msra.mxu0 0.0
  %1330 = vmatprep.subr.mxu0 0.0
  %1331 = vmatpush1.msra.mxu0 0.0
  %1332 = vmatprep.subr.mxu0 0.0
  %1333 = vmatpush1.msra.mxu0 0.0
  %1334 = vmatprep.subr.mxu0 0.0
  %1335 = vmatpush1.msra.mxu0 0.0
  %1336 = vmatprep.subr.mxu0 0.0
  %1337 = vmatpush1.msra.mxu0 0.0
  %1338 = vmatprep.subr.mxu0 0.0
  %1339 = vmatpush1.msra.mxu0 0.0
  %1340 = vmatprep.subr.mxu0 0.0
  %1341 = vmatpush1.msra.mxu0 0.0
  %1342 = vmatprep.subr.mxu0 0.0
  %1343 = vmatpush1.msra.mxu0 0.0
  %1344 = vmatprep.subr.mxu0 0.0
  %1345 = vmatpush1.msra.mxu0 0.0
  %1346 = vmatprep.subr.mxu0 0.0
  %1347 = vmatpush1.msra.mxu0 0.0
  %1348 = vmatprep.subr.mxu0 0.0
  %1349 = vmatpush1.msra.mxu0 0.0
  %1350 = vmatprep.subr.mxu0 0.0
  %1351 = vmatpush1.msra.mxu0 0.0
  %1352 = vmatprep.subr.mxu0 0.0
  %1353 = vmatpush1.msra.mxu0 0.0
  %1354 = vmatprep.subr.mxu0 0.0
  %1355 = vmatpush1.msra.mxu0 0.0
  %1356 = vmatprep.subr.mxu0 0.0
  %1357 = vmatpush1.msra.mxu0 0.0
  %1358 = vmatprep.subr.mxu0 0.0
  %1359 = vmatpush1.msra.mxu0 0.0
  %1360 = vmatprep.subr.mxu0 0.0
  %1361 = vmatpush1.msra.mxu0 0.0
  %1362 = vmatprep.subr.mxu0 0.0
  %1363 = vmatpush1.msra.mxu0 0.0
  %1364 = vmatprep.subr.mxu0 0.0
  %1365 = vmatpush1.msra.mxu0 0.0
  %1366 = vmatprep.subr.mxu0 0.0
  %1367 = vmatpush1.msra.mxu0 0.0
  %1368 = vmatprep.subr.mxu0 0.0
  %1369 = vmatpush1.msra.mxu0 0.0
  %1370 = vmatprep.subr.mxu0 0.0
  %1371 = vmatpush1.msra.mxu0 0.0
  %1372 = vmatprep.subr.mxu0 0.0
  %1373 = vmatpush1.msra.mxu0 0.0
  %1374 = vmatprep.subr.mxu0 0.0
  %1375 = vmatpush1.msra.mxu0 0.0
  %1376 = vmatprep.subr.mxu0 0.0
  %1377 = vmatpush1.msra.mxu0 0.0
  %1378 = vmatprep.subr.mxu0 0.0
  %1379 = vmatpush1.msra.mxu0 0.0
  %1380 = vmatprep.mubr.f32.mxu0 0.0
  %v1381 = vand.u32 %v399, 4294901760
  %1382 = vmatmul.mubr.f32.gmra.mrb[0].mxu0 %v1381
  %v1383 = vpop.f32.mrb[0].mxu0
  %v1384 = vadd.f32 %v1235, %v1383
  %v1385 = vpop.f32.mrb[0].mxu0
  %1386 = vmatprep.mubr.f32.mxu0 0.0
  %v1387 = vand.u32 %v401, 4294901760
  %1388 = vmatmul.mubr.f32.gmra.mrb[0].mxu0 %v1387
  %v1389 = vpop.f32.mrb[0].mxu0
  %v1390 = vadd.f32 %v1245, %v1389
  %v1391 = vpop.f32.mrb[0].mxu0
  %1392 = vmatprep.mubr.f32.mxu0 0.0
  %v1393 = vand.u32 %v403, 4294901760
  %1394 = vmatmul.mubr.f32.gmra.mrb[0].mxu0 %v1393
  %v1395 = vpop.f32.mrb[0].mxu0
  %v1396 = vadd.f32 %v1255, %v1395
  %v1397 = vpop.f32.mrb[0].mxu0
  %1398 = vmatprep.mubr.f32.mxu0 0.0
  %v1399 = vand.u32 %v405, 4294901760
  %1400 = vmatmul.mubr.f32.gmra.mrb[0].mxu0 %v1399
  %v1401 = vpop.f32.mrb[0].mxu0
  %v1402 = vadd.f32 %v1265, %v1401
  %v1403 = vpop.f32.mrb[0].mxu0
  %1404 = vmatprep.mubr.f32.mxu0 0.0
  %v1405 = vand.u32 %v407, 4294901760
  %1406 = vmatmul.mubr.f32.gmra.mrb[0].mxu0 %v1405
  %v1407 = vpop.f32.mrb[0].mxu0
  %v1408 = vadd.f32 %v1275, %v1407
  %v1409 = vpop.f32.mrb[0].mxu0
  %1410 = vmatprep.mubr.f32.mxu0 0.0
  %v1411 = vand.u32 %v409, 4294901760
  %1412 = vmatmul.mubr.f32.gmra.mrb[0].mxu0 %v1411
  %v1413 = vpop.f32.mrb[0].mxu0
  %v1414 = vadd.f32 %v1285, %v1413
  %v1415 = vpop.f32.mrb[0].mxu0
  %1416 = vmatprep.mubr.f32.mxu0 0.0
  %v1417 = vand.u32 %v411, 4294901760
  %1418 = vmatmul.mubr.f32.gmra.mrb[0].mxu0 %v1417
  %v1419 = vpop.f32.mrb[0].mxu0
  %v1420 = vadd.f32 %v1295, %v1419
  %v1421 = vpop.f32.mrb[0].mxu0
  %1422 = vmatprep.mubr.f32.mxu0 0.0
  %v1423 = vand.u32 %v413, 4294901760
  %1424 = vmatmul.mubr.f32.gmra.mrb[0].mxu0 %v1423
  %v1425 = vpop.f32.mrb[0].mxu0
  %v1426 = vadd.f32 %v1305, %v1425
  %v1427 = vpop.f32.mrb[0].mxu0
  %1428 = vdwg.mxu0
  %1429 = vmatprep.subr.mxu0 0.0
  %v1430 = vsub.f32 %v213, %v213
  %1431 = vmatpush1.msra.mxu0 %v1430
  %1432 = vmatprep.subr.mxu0 0.0
  %v1433 = vsub.f32 %v214, %v214
  %1434 = vmatpush1.msra.mxu0 %v1433
  %1435 = vmatprep.subr.mxu0 0.0
  %1436 = vmatpush1.msra.mxu0 0.0
  %1437 = vmatprep.subr.mxu0 0.0
  %1438 = vmatpush1.msra.mxu0 0.0
  %1439 = vmatprep.subr.mxu0 0.0
  %1440 = vmatpush1.msra.mxu0 0.0
  %1441 = vmatprep.subr.mxu0 0.0
  %1442 = vmatpush1.msra.mxu0 0.0
  %1443 = vmatprep.subr.mxu0 0.0
  %1444 = vmatpush1.msra.mxu0 0.0
  %1445 = vmatprep.subr.mxu0 0.0
  %1446 = vmatpush1.msra.mxu0 0.0
  %1447 = vmatprep.subr.mxu0 0.0
  %1448 = vmatpush1.msra.mxu0 0.0
  %1449 = vmatprep.subr.mxu0 0.0
  %1450 = vmatpush1.msra.mxu0 0.0
  %1451 = vmatprep.subr.mxu0 0.0
  %1452 = vmatpush1.msra.mxu0 0.0
  %1453 = vmatprep.subr.mxu0 0.0
  %1454 = vmatpush1.msra.mxu0 0.0
  %1455 = vmatprep.subr.mxu0 0.0
  %1456 = vmatpush1.msra.mxu0 0.0
  %1457 = vmatprep.subr.mxu0 0.0
  %1458 = vmatpush1.msra.mxu0 0.0
  %1459 = vmatprep.subr.mxu0 0.0
  %1460 = vmatpush1.msra.mxu0 0.0
  %1461 = vmatprep.subr.mxu0 0.0
  %1462 = vmatpush1.msra.mxu0 0.0
  %1463 = vmatprep.subr.mxu0 0.0
  %1464 = vmatpush1.msra.mxu0 0.0
  %1465 = vmatprep.subr.mxu0 0.0
  %1466 = vmatpush1.msra.mxu0 0.0
  %1467 = vmatprep.subr.mxu0 0.0
  %1468 = vmatpush1.msra.mxu0 0.0
  %1469 = vmatprep.subr.mxu0 0.0
  %1470 = vmatpush1.msra.mxu0 0.0
  %1471 = vmatprep.subr.mxu0 0.0
  %1472 = vmatpush1.msra.mxu0 0.0
  %1473 = vmatprep.subr.mxu0 0.0
  %1474 = vmatpush1.msra.mxu0 0.0
  %1475 = vmatprep.subr.mxu0 0.0
  %1476 = vmatpush1.msra.mxu0 0.0
  %1477 = vmatprep.subr.mxu0 0.0
  %1478 = vmatpush1.msra.mxu0 0.0
  %1479 = vmatprep.subr.mxu0 0.0
  %1480 = vmatpush1.msra.mxu0 0.0
  %1481 = vmatprep.subr.mxu0 0.0
  %1482 = vmatpush1.msra.mxu0 0.0
  %1483 = vmatprep.subr.mxu0 0.0
  %1484 = vmatpush1.msra.mxu0 0.0
  %1485 = vmatprep.subr.mxu0 0.0
  %1486 = vmatpush1.msra.mxu0 0.0
  %1487 = vmatprep.subr.mxu0 0.0
  %1488 = vmatpush1.msra.mxu0 0.0
  %1489 = vmatprep.subr.mxu0 0.0
  %1490 = vmatpush1.msra.mxu0 0.0
  %1491 = vmatprep.subr.mxu0 0.0
  %1492 = vmatpush1.msra.mxu0 0.0
  %1493 = vmatprep.subr.mxu0 0.0
  %1494 = vmatpush1.msra.mxu0 0.0
  %1495 = vmatprep.mubr.f32.mxu0 0.0
  %v1496 = vand.u32 %v399, 4294901760
  %v1497 = vsub.f32 %v399, %v1496
  %1498 = vmatmul.mubr.f32.gmra.mrb[0].mxu0 %v1497
  %v1499 = vpop.f32.mrb[0].mxu0
  %v1500 = vadd.f32 %v1384, %v1499
  %v1501 = vpop.f32.mrb[0].mxu0
  %1502 = vmatprep.mubr.f32.mxu0 0.0
  %v1503 = vand.u32 %v401, 4294901760
  %v1504 = vsub.f32 %v401, %v1503
  %1505 = vmatmul.mubr.f32.gmra.mrb[0].mxu0 %v1504
  %v1506 = vpop.f32.mrb[0].mxu0
  %v1507 = vadd.f32 %v1390, %v1506
  %v1508 = vpop.f32.mrb[0].mxu0
  %1509 = vmatprep.mubr.f32.mxu0 0.0
  %v1510 = vand.u32 %v403, 4294901760
  %v1511 = vsub.f32 %v403, %v1510
  %1512 = vmatmul.mubr.f32.gmra.mrb[0].mxu0 %v1511
  %v1513 = vpop.f32.mrb[0].mxu0
  %v1514 = vadd.f32 %v1396, %v1513
  %v1515 = vpop.f32.mrb[0].mxu0
  %1516 = vmatprep.mubr.f32.mxu0 0.0
  %v1517 = vand.u32 %v405, 4294901760
  %v1518 = vsub.f32 %v405, %v1517
  %1519 = vmatmul.mubr.f32.gmra.mrb[0].mxu0 %v1518
  %v1520 = vpop.f32.mrb[0].mxu0
  %v1521 = vadd.f32 %v1402, %v1520
  %v1522 = vpop.f32.mrb[0].mxu0
  %1523 = vmatprep.mubr.f32.mxu0 0.0
  %v1524 = vand.u32 %v407, 4294901760
  %v1525 = vsub.f32 %v407, %v1524
  %1526 = vmatmul.mubr.f32.gmra.mrb[0].mxu0 %v1525
  %v1527 = vpop.f32.mrb[0].mxu0
  %v1528 = vadd.f32 %v1408, %v1527
  %v1529 = vpop.f32.mrb[0].mxu0
  %1530 = vmatprep.mubr.f32.mxu0 0.0
  %v1531 = vand.u32 %v409, 4294901760
  %v1532 = vsub.f32 %v409, %v1531
  %1533 = vmatmul.mubr.f32.gmra.mrb[0].mxu0 %v1532
  %v1534 = vpop.f32.mrb[0].mxu0
  %v1535 = vadd.f32 %v1414, %v1534
  %v1536 = vpop.f32.mrb[0].mxu0
  %1537 = vmatprep.mubr.f32.mxu0 0.0
  %v1538 = vand.u32 %v411, 4294901760
  %v1539 = vsub.f32 %v411, %v1538
  %1540 = vmatmul.mubr.f32.gmra.mrb[0].mxu0 %v1539
  %v1541 = vpop.f32.mrb[0].mxu0
  %v1542 = vadd.f32 %v1420, %v1541
  %v1543 = vpop.f32.mrb[0].mxu0
  %1544 = vmatprep.mubr.f32.mxu0 0.0
  %v1545 = vand.u32 %v413, 4294901760
  %v1546 = vsub.f32 %v413, %v1545
  %1547 = vmatmul.mubr.f32.gmra.mrb[0].mxu0 %v1546
  %v1548 = vpop.f32.mrb[0].mxu0
  %v1549 = vadd.f32 %v1426, %v1548
  %v1550 = vpop.f32.mrb[0].mxu0
  %1551 = vdwg.mxu0
  %1552 = vmatprep.subr.mxu0 0.0
  %1553 = vmatpush1.msra.mxu0 %v213
  %1554 = vmatprep.subr.mxu0 0.0
  %1555 = vmatpush1.msra.mxu0 %v214
  %1556 = vmatprep.subr.mxu0 0.0
  %1557 = vmatpush1.msra.mxu0 0.0
  %1558 = vmatprep.subr.mxu0 0.0
  %1559 = vmatpush1.msra.mxu0 0.0
  %1560 = vmatprep.subr.mxu0 0.0
  %1561 = vmatpush1.msra.mxu0 0.0
  %1562 = vmatprep.subr.mxu0 0.0
  %1563 = vmatpush1.msra.mxu0 0.0
  %1564 = vmatprep.subr.mxu0 0.0
  %1565 = vmatpush1.msra.mxu0 0.0
  %1566 = vmatprep.subr.mxu0 0.0
  %1567 = vmatpush1.msra.mxu0 0.0
  %1568 = vmatprep.subr.mxu0 0.0
  %1569 = vmatpush1.msra.mxu0 0.0
  %1570 = vmatprep.subr.mxu0 0.0
  %1571 = vmatpush1.msra.mxu0 0.0
  %1572 = vmatprep.subr.mxu0 0.0
  %1573 = vmatpush1.msra.mxu0 0.0
  %1574 = vmatprep.subr.mxu0 0.0
  %1575 = vmatpush1.msra.mxu0 0.0
  %1576 = vmatprep.subr.mxu0 0.0
  %1577 = vmatpush1.msra.mxu0 0.0
  %1578 = vmatprep.subr.mxu0 0.0
  %1579 = vmatpush1.msra.mxu0 0.0
  %1580 = vmatprep.subr.mxu0 0.0
  %1581 = vmatpush1.msra.mxu0 0.0
  %1582 = vmatprep.subr.mxu0 0.0
  %1583 = vmatpush1.msra.mxu0 0.0
  %1584 = vmatprep.subr.mxu0 0.0
  %1585 = vmatpush1.msra.mxu0 0.0
  %1586 = vmatprep.subr.mxu0 0.0
  %1587 = vmatpush1.msra.mxu0 0.0
  %1588 = vmatprep.subr.mxu0 0.0
  %1589 = vmatpush1.msra.mxu0 0.0
  %1590 = vmatprep.subr.mxu0 0.0
  %1591 = vmatpush1.msra.mxu0 0.0
  %1592 = vmatprep.subr.mxu0 0.0
  %1593 = vmatpush1.msra.mxu0 0.0
  %1594 = vmatprep.subr.mxu0 0.0
  %1595 = vmatpush1.msra.mxu0 0.0
  %1596 = vmatprep.subr.mxu0 0.0
  %1597 = vmatpush1.msra.mxu0 0.0
  %1598 = vmatprep.subr.mxu0 0.0
  %1599 = vmatpush1.msra.mxu0 0.0
  %1600 = vmatprep.subr.mxu0 0.0
  %1601 = vmatpush1.msra.mxu0 0.0
  %1602 = vmatprep.subr.mxu0 0.0
  %1603 = vmatpush1.msra.mxu0 0.0
  %1604 = vmatprep.subr.mxu0 0.0
  %1605 = vmatpush1.msra.mxu0 0.0
  %1606 = vmatprep.subr.mxu0 0.0
  %1607 = vmatpush1.msra.mxu0 0.0
  %1608 = vmatprep.subr.mxu0 0.0
  %1609 = vmatpush1.msra.mxu0 0.0
  %1610 = vmatprep.subr.mxu0 0.0
  %1611 = vmatpush1.msra.mxu0 0.0
  %1612 = vmatprep.subr.mxu0 0.0
  %1613 = vmatpush1.msra.mxu0 0.0
  %1614 = vmatprep.subr.mxu0 0.0
  %1615 = vmatpush1.msra.mxu0 0.0
  %1616 = vmatprep.mubr.f32.mxu0 0.0
  %v1617 = vand.u32 %v399, 4294901760
  %v1618 = vsub.f32 %v399, %v1617
  %v1619 = vand.u32 %v1618, 4294901760
  %1620 = vmatmul.mubr.f32.gmra.mrb[0].mxu0 %v1619
  %v1621 = vpop.f32.mrb[0].mxu0
  %v1622 = vadd.f32 %v1500, %v1621
  %v1623 = vpop.f32.mrb[0].mxu0
  %1624 = vmatprep.mubr.f32.mxu0 0.0
  %v1625 = vand.u32 %v401, 4294901760
  %v1626 = vsub.f32 %v401, %v1625
  %v1627 = vand.u32 %v1626, 4294901760
  %1628 = vmatmul.mubr.f32.gmra.mrb[0].mxu0 %v1627
  %v1629 = vpop.f32.mrb[0].mxu0
  %v1630 = vadd.f32 %v1507, %v1629
  %v1631 = vpop.f32.mrb[0].mxu0
  %1632 = vmatprep.mubr.f32.mxu0 0.0
  %v1633 = vand.u32 %v403, 4294901760
  %v1634 = vsub.f32 %v403, %v1633
  %v1635 = vand.u32 %v1634, 4294901760
  %1636 = vmatmul.mubr.f32.gmra.mrb[0].mxu0 %v1635
  %v1637 = vpop.f32.mrb[0].mxu0
  %v1638 = vadd.f32 %v1514, %v1637
  %v1639 = vpop.f32.mrb[0].mxu0
  %1640 = vmatprep.mubr.f32.mxu0 0.0
  %v1641 = vand.u32 %v405, 4294901760
  %v1642 = vsub.f32 %v405, %v1641
  %v1643 = vand.u32 %v1642, 4294901760
  %1644 = vmatmul.mubr.f32.gmra.mrb[0].mxu0 %v1643
  %v1645 = vpop.f32.mrb[0].mxu0
  %v1646 = vadd.f32 %v1521, %v1645
  %v1647 = vpop.f32.mrb[0].mxu0
  %1648 = vmatprep.mubr.f32.mxu0 0.0
  %v1649 = vand.u32 %v407, 4294901760
  %v1650 = vsub.f32 %v407, %v1649
  %v1651 = vand.u32 %v1650, 4294901760
  %1652 = vmatmul.mubr.f32.gmra.mrb[0].mxu0 %v1651
  %v1653 = vpop.f32.mrb[0].mxu0
  %v1654 = vadd.f32 %v1528, %v1653
  %v1655 = vpop.f32.mrb[0].mxu0
  %1656 = vmatprep.mubr.f32.mxu0 0.0
  %v1657 = vand.u32 %v409, 4294901760
  %v1658 = vsub.f32 %v409, %v1657
  %v1659 = vand.u32 %v1658, 4294901760
  %1660 = vmatmul.mubr.f32.gmra.mrb[0].mxu0 %v1659
  %v1661 = vpop.f32.mrb[0].mxu0
  %v1662 = vadd.f32 %v1535, %v1661
  %v1663 = vpop.f32.mrb[0].mxu0
  %1664 = vmatprep.mubr.f32.mxu0 0.0
  %v1665 = vand.u32 %v411, 4294901760
  %v1666 = vsub.f32 %v411, %v1665
  %v1667 = vand.u32 %v1666, 4294901760
  %1668 = vmatmul.mubr.f32.gmra.mrb[0].mxu0 %v1667
  %v1669 = vpop.f32.mrb[0].mxu0
  %v1670 = vadd.f32 %v1542, %v1669
  %v1671 = vpop.f32.mrb[0].mxu0
  %1672 = vmatprep.mubr.f32.mxu0 0.0
  %v1673 = vand.u32 %v413, 4294901760
  %v1674 = vsub.f32 %v413, %v1673
  %v1675 = vand.u32 %v1674, 4294901760
  %1676 = vmatmul.mubr.f32.gmra.mrb[0].mxu0 %v1675
  %v1677 = vpop.f32.mrb[0].mxu0
  %v1678 = vadd.f32 %v1549, %v1677
  %v1679 = vpop.f32.mrb[0].mxu0
  %1680 = vdwg.mxu0
  %1681 = vmatprep.subr.mxu0 0.0
  %v1682 = vsub.f32 %v213, %v213
  %v1683 = vand.u32 %v1682, 4294901760
  %1684 = vmatpush1.msra.mxu0 %v1683
  %1685 = vmatprep.subr.mxu0 0.0
  %v1686 = vsub.f32 %v214, %v214
  %v1687 = vand.u32 %v1686, 4294901760
  %1688 = vmatpush1.msra.mxu0 %v1687
  %1689 = vmatprep.subr.mxu0 0.0
  %1690 = vmatpush1.msra.mxu0 0.0
  %1691 = vmatprep.subr.mxu0 0.0
  %1692 = vmatpush1.msra.mxu0 0.0
  %1693 = vmatprep.subr.mxu0 0.0
  %1694 = vmatpush1.msra.mxu0 0.0
  %1695 = vmatprep.subr.mxu0 0.0
  %1696 = vmatpush1.msra.mxu0 0.0
  %1697 = vmatprep.subr.mxu0 0.0
  %1698 = vmatpush1.msra.mxu0 0.0
  %1699 = vmatprep.subr.mxu0 0.0
  %1700 = vmatpush1.msra.mxu0 0.0
  %1701 = vmatprep.subr.mxu0 0.0
  %1702 = vmatpush1.msra.mxu0 0.0
  %1703 = vmatprep.subr.mxu0 0.0
  %1704 = vmatpush1.msra.mxu0 0.0
  %1705 = vmatprep.subr.mxu0 0.0
  %1706 = vmatpush1.msra.mxu0 0.0
  %1707 = vmatprep.subr.mxu0 0.0
  %1708 = vmatpush1.msra.mxu0 0.0
  %1709 = vmatprep.subr.mxu0 0.0
  %1710 = vmatpush1.msra.mxu0 0.0
  %1711 = vmatprep.subr.mxu0 0.0
  %1712 = vmatpush1.msra.mxu0 0.0
  %1713 = vmatprep.subr.mxu0 0.0
  %1714 = vmatpush1.msra.mxu0 0.0
  %1715 = vmatprep.subr.mxu0 0.0
  %1716 = vmatpush1.msra.mxu0 0.0
  %1717 = vmatprep.subr.mxu0 0.0
  %1718 = vmatpush1.msra.mxu0 0.0
  %1719 = vmatprep.subr.mxu0 0.0
  %1720 = vmatpush1.msra.mxu0 0.0
  %1721 = vmatprep.subr.mxu0 0.0
  %1722 = vmatpush1.msra.mxu0 0.0
  %1723 = vmatprep.subr.mxu0 0.0
  %1724 = vmatpush1.msra.mxu0 0.0
  %1725 = vmatprep.subr.mxu0 0.0
  %1726 = vmatpush1.msra.mxu0 0.0
  %1727 = vmatprep.subr.mxu0 0.0
  %1728 = vmatpush1.msra.mxu0 0.0
  %1729 = vmatprep.subr.mxu0 0.0
  %1730 = vmatpush1.msra.mxu0 0.0
  %1731 = vmatprep.subr.mxu0 0.0
  %1732 = vmatpush1.msra.mxu0 0.0
  %1733 = vmatprep.subr.mxu0 0.0
  %1734 = vmatpush1.msra.mxu0 0.0
  %1735 = vmatprep.subr.mxu0 0.0
  %1736 = vmatpush1.msra.mxu0 0.0
  %1737 = vmatprep.subr.mxu0 0.0
  %1738 = vmatpush1.msra.mxu0 0.0
  %1739 = vmatprep.subr.mxu0 0.0
  %1740 = vmatpush1.msra.mxu0 0.0
  %1741 = vmatprep.subr.mxu0 0.0
  %1742 = vmatpush1.msra.mxu0 0.0
  %1743 = vmatprep.subr.mxu0 0.0
  %1744 = vmatpush1.msra.mxu0 0.0
  %1745 = vmatprep.subr.mxu0 0.0
  %1746 = vmatpush1.msra.mxu0 0.0
  %1747 = vmatprep.subr.mxu0 0.0
  %1748 = vmatpush1.msra.mxu0 0.0
  %1749 = vmatprep.mubr.f32.mxu0 0.0
  %v1750 = vand.u32 %v399, 4294901760
  %1751 = vmatmul.mubr.f32.gmra.mrb[0].mxu0 %v1750
  %v1752 = vpop.f32.mrb[0].mxu0
  %v1753 = vadd.f32 %v1622, %v1752
  %v1754 = vpop.f32.mrb[0].mxu0
  %1755 = vmatprep.mubr.f32.mxu0 0.0
  %v1756 = vand.u32 %v401, 4294901760
  %1757 = vmatmul.mubr.f32.gmra.mrb[0].mxu0 %v1756
  %v1758 = vpop.f32.mrb[0].mxu0
  %v1759 = vadd.f32 %v1630, %v1758
  %v1760 = vpop.f32.mrb[0].mxu0
  %1761 = vmatprep.mubr.f32.mxu0 0.0
  %v1762 = vand.u32 %v403, 4294901760
  %1763 = vmatmul.mubr.f32.gmra.mrb[0].mxu0 %v1762
  %v1764 = vpop.f32.mrb[0].mxu0
  %v1765 = vadd.f32 %v1638, %v1764
  %v1766 = vpop.f32.mrb[0].mxu0
  %1767 = vmatprep.mubr.f32.mxu0 0.0
  %v1768 = vand.u32 %v405, 4294901760
  %1769 = vmatmul.mubr.f32.gmra.mrb[0].mxu0 %v1768
  %v1770 = vpop.f32.mrb[0].mxu0
  %v1771 = vadd.f32 %v1646, %v1770
  %v1772 = vpop.f32.mrb[0].mxu0
  %1773 = vmatprep.mubr.f32.mxu0 0.0
  %v1774 = vand.u32 %v407, 4294901760
  %1775 = vmatmul.mubr.f32.gmra.mrb[0].mxu0 %v1774
  %v1776 = vpop.f32.mrb[0].mxu0
  %v1777 = vadd.f32 %v1654, %v1776
  %v1778 = vpop.f32.mrb[0].mxu0
  %1779 = vmatprep.mubr.f32.mxu0 0.0
  %v1780 = vand.u32 %v409, 4294901760
  %1781 = vmatmul.mubr.f32.gmra.mrb[0].mxu0 %v1780
  %v1782 = vpop.f32.mrb[0].mxu0
  %v1783 = vadd.f32 %v1662, %v1782
  %v1784 = vpop.f32.mrb[0].mxu0
  %1785 = vmatprep.mubr.f32.mxu0 0.0
  %v1786 = vand.u32 %v411, 4294901760
  %1787 = vmatmul.mubr.f32.gmra.mrb[0].mxu0 %v1786
  %v1788 = vpop.f32.mrb[0].mxu0
  %v1789 = vadd.f32 %v1670, %v1788
  %v1790 = vpop.f32.mrb[0].mxu0
  %1791 = vmatprep.mubr.f32.mxu0 0.0
  %v1792 = vand.u32 %v413, 4294901760
  %1793 = vmatmul.mubr.f32.gmra.mrb[0].mxu0 %v1792
  %v1794 = vpop.f32.mrb[0].mxu0
  %v1795 = vadd.f32 %v1678, %v1794
  %v1796 = vpop.f32.mrb[0].mxu0
  %1797 = vdwg.mxu0
  %1798 = vmatprep.subr.mxu0 0.0
  %1799 = vmatpush1.msra.mxu0 %v213
  %1800 = vmatprep.subr.mxu0 0.0
  %1801 = vmatpush1.msra.mxu0 %v214
  %1802 = vmatprep.subr.mxu0 0.0
  %1803 = vmatpush1.msra.mxu0 0.0
  %1804 = vmatprep.subr.mxu0 0.0
  %1805 = vmatpush1.msra.mxu0 0.0
  %1806 = vmatprep.subr.mxu0 0.0
  %1807 = vmatpush1.msra.mxu0 0.0
  %1808 = vmatprep.subr.mxu0 0.0
  %1809 = vmatpush1.msra.mxu0 0.0
  %1810 = vmatprep.subr.mxu0 0.0
  %1811 = vmatpush1.msra.mxu0 0.0
  %1812 = vmatprep.subr.mxu0 0.0
  %1813 = vmatpush1.msra.mxu0 0.0
  %1814 = vmatprep.subr.mxu0 0.0
  %1815 = vmatpush1.msra.mxu0 0.0
  %1816 = vmatprep.subr.mxu0 0.0
  %1817 = vmatpush1.msra.mxu0 0.0
  %1818 = vmatprep.subr.mxu0 0.0
  %1819 = vmatpush1.msra.mxu0 0.0
  %1820 = vmatprep.subr.mxu0 0.0
  %1821 = vmatpush1.msra.mxu0 0.0
  %1822 = vmatprep.subr.mxu0 0.0
  %1823 = vmatpush1.msra.mxu0 0.0
  %1824 = vmatprep.subr.mxu0 0.0
  %1825 = vmatpush1.msra.mxu0 0.0
  %1826 = vmatprep.subr.mxu0 0.0
  %1827 = vmatpush1.msra.mxu0 0.0
  %1828 = vmatprep.subr.mxu0 0.0
  %1829 = vmatpush1.msra.mxu0 0.0
  %1830 = vmatprep.subr.mxu0 0.0
  %1831 = vmatpush1.msra.mxu0 0.0
  %1832 = vmatprep.subr.mxu0 0.0
  %1833 = vmatpush1.msra.mxu0 0.0
  %1834 = vmatprep.subr.mxu0 0.0
  %1835 = vmatpush1.msra.mxu0 0.0
  %1836 = vmatprep.subr.mxu0 0.0
  %1837 = vmatpush1.msra.mxu0 0.0
  %1838 = vmatprep.subr.mxu0 0.0
  %1839 = vmatpush1.msra.mxu0 0.0
  %1840 = vmatprep.subr.mxu0 0.0
  %1841 = vmatpush1.msra.mxu0 0.0
  %1842 = vmatprep.subr.mxu0 0.0
  %1843 = vmatpush1.msra.mxu0 0.0
  %1844 = vmatprep.subr.mxu0 0.0
  %1845 = vmatpush1.msra.mxu0 0.0
  %1846 = vmatprep.subr.mxu0 0.0
  %1847 = vmatpush1.msra.mxu0 0.0
  %1848 = vmatprep.subr.mxu0 0.0
  %1849 = vmatpush1.msra.mxu0 0.0
  %1850 = vmatprep.subr.mxu0 0.0
  %1851 = vmatpush1.msra.mxu0 0.0
  %1852 = vmatprep.subr.mxu0 0.0
  %1853 = vmatpush1.msra.mxu0 0.0
  %1854 = vmatprep.subr.mxu0 0.0
  %1855 = vmatpush1.msra.mxu0 0.0
  %1856 = vmatprep.subr.mxu0 0.0
  %1857 = vmatpush1.msra.mxu0 0.0
  %1858 = vmatprep.subr.mxu0 0.0
  %1859 = vmatpush1.msra.mxu0 0.0
  %1860 = vmatprep.subr.mxu0 0.0
  %1861 = vmatpush1.msra.mxu0 0.0
  %1862 = vmatprep.mubr.f32.mxu0 0.0
  %v1863 = vand.u32 %v399, 4294901760
  %1864 = vmatmul.mubr.f32.gmra.mrb[0].mxu0 %v1863
  %v1865 = vpop.f32.mrb[0].mxu0
  %v1866 = vadd.f32 %v1753, %v1865
  %v1867 = vpop.f32.mrb[0].mxu0
  %1868 = vmatprep.mubr.f32.mxu0 0.0
  %v1869 = vand.u32 %v401, 4294901760
  %1870 = vmatmul.mubr.f32.gmra.mrb[0].mxu0 %v1869
  %v1871 = vpop.f32.mrb[0].mxu0
  %v1872 = vadd.f32 %v1759, %v1871
  %v1873 = vpop.f32.mrb[0].mxu0
  %1874 = vmatprep.mubr.f32.mxu0 0.0
  %v1875 = vand.u32 %v403, 4294901760
  %1876 = vmatmul.mubr.f32.gmra.mrb[0].mxu0 %v1875
  %v1877 = vpop.f32.mrb[0].mxu0
  %v1878 = vadd.f32 %v1765, %v1877
  %v1879 = vpop.f32.mrb[0].mxu0
  %1880 = vmatprep.mubr.f32.mxu0 0.0
  %v1881 = vand.u32 %v405, 4294901760
  %1882 = vmatmul.mubr.f32.gmra.mrb[0].mxu0 %v1881
  %v1883 = vpop.f32.mrb[0].mxu0
  %v1884 = vadd.f32 %v1771, %v1883
  %v1885 = vpop.f32.mrb[0].mxu0
  %1886 = vmatprep.mubr.f32.mxu0 0.0
  %v1887 = vand.u32 %v407, 4294901760
  %1888 = vmatmul.mubr.f32.gmra.mrb[0].mxu0 %v1887
  %v1889 = vpop.f32.mrb[0].mxu0
  %v1890 = vadd.f32 %v1777, %v1889
  %v1891 = vpop.f32.mrb[0].mxu0
  %1892 = vmatprep.mubr.f32.mxu0 0.0
  %v1893 = vand.u32 %v409, 4294901760
  %1894 = vmatmul.mubr.f32.gmra.mrb[0].mxu0 %v1893
  %v1895 = vpop.f32.mrb[0].mxu0
  %v1896 = vadd.f32 %v1783, %v1895
  %v1897 = vpop.f32.mrb[0].mxu0
  %1898 = vmatprep.mubr.f32.mxu0 0.0
  %v1899 = vand.u32 %v411, 4294901760
  %1900 = vmatmul.mubr.f32.gmra.mrb[0].mxu0 %v1899
  %v1901 = vpop.f32.mrb[0].mxu0
  %v1902 = vadd.f32 %v1789, %v1901
  %v1903 = vpop.f32.mrb[0].mxu0
  %1904 = vmatprep.mubr.f32.mxu0 0.0
  %v1905 = vand.u32 %v413, 4294901760
  %1906 = vmatmul.mubr.f32.gmra.mrb[0].mxu0 %v1905
  %v1907 = vpop.f32.mrb[0].mxu0
  %v1908 = vadd.f32 %v1795, %v1907
  %v1909 = vpop.f32.mrb[0].mxu0
  %1910 = vdwg.mxu0
  %v1911 = vmax.f32 %v1118, %v1866
  %v1912 = vmax.f32 %v1124, %v1872
  %v1913 = vmax.f32 %v1130, %v1878
  %v1914 = vmax.f32 %v1136, %v1884
  %v1915 = vmax.f32 %v1142, %v1890
  %v1916 = vmax.f32 %v1148, %v1896
  %v1917 = vmax.f32 %v1154, %v1902
  %v1918 = vmax.f32 %v1160, %v1908
  %vm1919 = vcmask 64512
  %1920 = vst.msk [vmem:[%s1] sm:$0xff] %vm1919, %v1911
  %1921 = vst.msk [vmem:[%s1 + $0x8] sm:$0xff] %vm1919, %v1912
  %1922 = vst.msk [vmem:[%s1 + $0x10] sm:$0xff] %vm1919, %v1913
  %1923 = vst.msk [vmem:[%s1 + $0x18] sm:$0xff] %vm1919, %v1914
  %1924 = vst.msk [vmem:[%s1 + $0x20] sm:$0xff] %vm1919, %v1915
  %1925 = vst.msk [vmem:[%s1 + $0x28] sm:$0xff] %vm1919, %v1916
  %1926 = vst.msk [vmem:[%s1 + $0x30] sm:$0xff] %vm1919, %v1917
  %1927 = vst.msk [vmem:[%s1 + $0x38] sm:$0xff] %vm1919, %v1918
  // Predicated region
  $region6: #{tpu_custom_call.1} parent=0 // pred_check
    _
  $region7: #{tpu_custom_call.1} parent=0 // pred_check_branch
    %1929 = sbr.rel (0) target = $region9
  $region8: #{tpu_custom_call.1} parent=0 // pred_region
    _
  $region9: #{tpu_custom_call.1} parent=0 // pred_fallthru
    _
  // Predicated region
  $region10: #{tpu_custom_call.1} parent=0 // pred_check
    _
  $region11: #{tpu_custom_call.1} parent=0 // pred_check_branch
    %1931 = sbr.rel (0) target = $region13
  $region12: #{tpu_custom_call.1} parent=0 // pred_region
    _
  $region13: #{tpu_custom_call.1} parent=0 // pred_fallthru
    _

</llo_original>
